<compile_context>
chip_gen: v7x
topology: tpu7x:2x2x1
jax: 0.10.0
libtpu: 0.0.40
codegen_flags: <defaults>
</compile_context>

<pallas_src>
import functools

import jax
import jax.numpy as jnp
from jax import lax
from jax.experimental import pallas as pl
from jax.experimental.pallas import tpu as pltpu

_LANE = 128  # vreg lane width; q accumulator is padded to this


def _gru_ig_critic_kernel(
    x_ref,     # (T, bb, I)   rollout inputs for this batch block (VMEM resident)
    h0_ref,    # (bb, H)      initial hidden
    w1_ref,    # (I, H)       fc1 weight (transposed)
    b1_ref,    # (1, H)       fc1 bias
    wg_ref,    # (2H, 4H)     fused GRU gate weights, columns [ r | z | i_n | h_n ]
    bg_ref,    # (1, 4H)      fused GRU gate biases
    w2_ref,    # (1, H)       fc2 weight row
    b2_ref,    # (1, 1)       fc2 bias
    q_ref,     # (bb, Tp)     q per step, lane-dense, written once
    hout_ref,  # (bb, H)      final hidden, written once
    *,
    H, T, unroll,
):
    bb = h0_ref.shape[0]
    Tp = q_ref.shape[-1]

    # Hoist all weights out of the time loop (constant, VMEM resident).
    w1 = w1_ref[...]
    wd = w1.dtype                  # matmul input dtype (f32, or pre-cast bf16)
    b1 = b1_ref[...]
    wg = wg_ref[...]
    wg_x = wg[:H]                  # rows fed by x1   (static sublane slice)
    wg_h = wg[H:]                  # rows fed by h
    bg = bg_ref[...]
    w2 = w2_ref[...]
    b2 = b2_ref[...]

    lane_t = lax.broadcasted_iota(jnp.int32, (bb, Tp), 1)

    def step(t, carry):
        h, q_acc = carry                                    # h: (bb, H) f32
        x = x_ref[t]                                        # (bb, I)

        # fc1 + ReLU.
        x1 = jnp.dot(x.astype(wd), w1,
                     preferred_element_type=jnp.float32) + b1
        x1 = jnp.maximum(x1, 0.0)                           # (bb, H)

        # Fused gate GEMM as two accumulating matmuls (no [x1|h] concat copy):
        #   g = x1 @ Wg_x + h @ Wg_h + bg
        # Column groups (each H lanes): [ r_pre | z_pre | i_n | h_n ]
        # (bir+bhr and biz+bhz pre-added; bhn kept separate for the n-gate).
        g = (jnp.dot(x1.astype(wd), wg_x, preferred_element_type=jnp.float32)
             + jnp.dot(h.astype(wd), wg_h, preferred_element_type=jnp.float32)
             + bg)

        r = jax.nn.sigmoid(g[:, 0 * H:1 * H])
        z = jax.nn.sigmoid(g[:, 1 * H:2 * H])
        n = jnp.tanh(g[:, 2 * H:3 * H] + r * g[:, 3 * H:4 * H])
        h_new = (1.0 - z) * n + z * h                       # (bb, H) f32

        # fc2 on the VPU/XLU (multiply + lane reduce) — no extra MXU drain.
        q_t = jnp.sum(h_new * w2, axis=-1, keepdims=True) + b2   # (bb, 1)

        # Lane-dense q accumulation; single HBM writeback after the loop.
        q_acc = jnp.where(lane_t == t, q_t, q_acc)
        return h_new, q_acc

    h0 = h0_ref[...].astype(jnp.float32)
    q0 = jnp.zeros((bb, Tp), jnp.float32)
    # TODO(synk): for very long rollouts, cap the unroll factor and hold the
    # gate RHS MXU-resident via pltpu.matmul_push_rhs / matmul_acc_lhs (v5e/v6e).
    h_fin, q_acc = lax.fori_loop(0, T, step, (h0, q0), unroll=unroll)

    q_ref[...] = q_acc.astype(q_ref.dtype)
    hout_ref[...] = h_fin.astype(hout_ref.dtype)


def pack_params(p, *, param_dtype=jnp.float32):
    """Pack PyTorch-layout parameters into the dense fused kernel layout.

    param_dtype=jnp.bfloat16 pre-casts the matmul weights offline (v6e/v7x);
    biases, the hidden carry and all elementwise gate math stay f32.
    """
    H, I = p["fc1_w"].shape
    f32 = jnp.float32

    w1 = jnp.asarray(p["fc1_w"].T, f32)                     # (I, H)
    b1 = jnp.asarray(p["fc1_b"], f32).reshape(1, H)

    wir, wiz, win = p["w_ih"][:H], p["w_ih"][H:2 * H], p["w_ih"][2 * H:]
    whr, whz, whn = p["w_hh"][:H], p["w_hh"][H:2 * H], p["w_hh"][2 * H:]
    bir, biz, bin_ = p["b_ih"][:H], p["b_ih"][H:2 * H], p["b_ih"][2 * H:]
    bhr, bhz, bhn = p["b_hh"][:H], p["b_hh"][H:2 * H], p["b_hh"][2 * H:]

    # Dense fused gate weights: rows [0:H) take x1, rows [H:2H) take h;
    # columns are the contiguous H-wide groups [ r | z | i_n | h_n ].
    wg = jnp.zeros((2 * H, 4 * H), f32)
    wg = wg.at[:H, 0 * H:1 * H].set(wir.T)
    wg = wg.at[:H, 1 * H:2 * H].set(wiz.T)
    wg = wg.at[:H, 2 * H:3 * H].set(win.T)
    wg = wg.at[H:, 0 * H:1 * H].set(whr.T)
    wg = wg.at[H:, 1 * H:2 * H].set(whz.T)
    wg = wg.at[H:, 3 * H:4 * H].set(whn.T)

    bg = jnp.concatenate([bir + bhr, biz + bhz, bin_, bhn]).reshape(1, 4 * H)
    bg = bg.astype(f32)

    w2 = jnp.asarray(p["fc2_w"], f32).reshape(1, H)
    b2 = jnp.asarray(p["fc2_b"], f32).reshape(1, 1)

    return {"w1": w1.astype(param_dtype), "b1": b1,
            "wg": wg.astype(param_dtype), "bg": bg,
            "w2": w2, "b2": b2, "H": H, "I": I}


def gru_ig_critic_rollout(inputs_seq, hidden0, packed, *, batch_block=128):
    """Run T sequential GruIGCritic.forward steps in one pallas_call.

    inputs_seq: (T, B, I) f32; hidden0: (B, H) f32.  Rows of B are independent
    recurrences sharing weights (B == 1 matches the module exactly).
    Returns (q_seq (T, B, 1), h_final (B, H)).
    """
    T, B, I = inputs_seq.shape
    H = packed["H"]
    assert hidden0.shape == (B, H)

    bb = min(B, batch_block)
    nb = -(-B // bb)                                   # cdiv
    Bp = nb * bb
    Tp = ((T + _LANE - 1) // _LANE) * _LANE            # lane-dense q writeback

    x = inputs_seq.astype(jnp.float32)
    h0 = hidden0.astype(jnp.float32)
    if Bp != B:
        x = jnp.pad(x, ((0, 0), (0, Bp - B), (0, 0)))
        h0 = jnp.pad(h0, ((0, Bp - B), (0, 0)))

    unroll = True if T <= 64 else False

    kernel = functools.partial(_gru_ig_critic_kernel, H=H, T=T, unroll=unroll)

    grid_spec = pltpu.PrefetchScalarGridSpec(
        num_scalar_prefetch=0,
        grid=(nb,),                                    # batch blocks only
        in_specs=[
            pl.BlockSpec((T, bb, I), lambda b: (0, b, 0)),    # full rollout inputs
            pl.BlockSpec((bb, H), lambda b: (b, 0)),          # initial hidden
            pl.BlockSpec((I, H), lambda b: (0, 0)),           # fc1 weight
            pl.BlockSpec((1, H), lambda b: (0, 0)),           # fc1 bias
            pl.BlockSpec((2 * H, 4 * H), lambda b: (0, 0)),   # fused gate weights
            pl.BlockSpec((1, 4 * H), lambda b: (0, 0)),       # fused gate bias
            pl.BlockSpec((1, H), lambda b: (0, 0)),           # fc2 weight row
            pl.BlockSpec((1, 1), lambda b: (0, 0)),           # fc2 bias
        ],
        out_specs=(
            pl.BlockSpec((bb, Tp), lambda b: (b, 0)),         # q (lane-dense)
            pl.BlockSpec((bb, H), lambda b: (b, 0)),          # final hidden
        ),
    )

    q_lanes, h_out = pl.pallas_call(
        kernel,
        grid_spec=grid_spec,
        out_shape=(
            jax.ShapeDtypeStruct((Bp, Tp), jnp.float32),
            jax.ShapeDtypeStruct((Bp, H), jnp.float32),
        ),
        compiler_params=pltpu.CompilerParams(
            dimension_semantics=("parallel",)),               # independent batch blocks
    )(x, h0, packed["w1"], packed["b1"], packed["wg"], packed["bg"],
      packed["w2"], packed["b2"])

    q_seq = jnp.transpose(q_lanes[:B, :T], (1, 0))[:, :, None]   # (T, B, 1)
    return q_seq, h_out[:B]


def gru_ig_critic_forward(inputs, hidden_state, packed):
    """Exact single-step equivalent of GruIGCritic.forward(inputs, hidden_state)."""
    H = packed["H"]
    h_in = jnp.asarray(hidden_state, jnp.float32).reshape(1, H)
    x = jnp.asarray(inputs, jnp.float32).reshape(1, 1, -1)       # (T=1, B=1, I)
    q_seq, h = gru_ig_critic_rollout(x, h_in, packed)
    return q_seq[0], h                                           # (1, 1), (1, H)


def init_params(key, input_shape, hidden_dim):
    """Deterministic synthetic parameters in PyTorch layout."""
    ks = jax.random.split(key, 8)
    s = 0.1
    H = hidden_dim
    return {
        "fc1_w": s * jax.random.normal(ks[0], (H, input_shape), jnp.float32),
        "fc1_b": s * jax.random.normal(ks[1], (H,), jnp.float32),
        "w_ih":  s * jax.random.normal(ks[2], (3 * H, H), jnp.float32),
        "b_ih":  s * jax.random.normal(ks[3], (3 * H,), jnp.float32),
        "w_hh":  s * jax.random.normal(ks[4], (3 * H, H), jnp.float32),
        "b_hh":  s * jax.random.normal(ks[5], (3 * H,), jnp.float32),
        "fc2_w": s * jax.random.normal(ks[6], (1, H), jnp.float32),
        "fc2_b": s * jax.random.normal(ks[7], (1,), jnp.float32),
    }


def _reference_rollout(inputs_seq, hidden0, p):
    """Pure-JAX reference: T sequential applications of GruIGCritic.forward."""
    H = hidden0.shape[-1]

    def step(h, x):
        x1 = jnp.maximum(x @ p["fc1_w"].T + p["fc1_b"], 0.0)
        gi = x1 @ p["w_ih"].T + p["b_ih"]
        gh = h @ p["w_hh"].T + p["b_hh"]
        r = jax.nn.sigmoid(gi[:, :H] + gh[:, :H])
        z = jax.nn.sigmoid(gi[:, H:2 * H] + gh[:, H:2 * H])
        n = jnp.tanh(gi[:, 2 * H:] + r * gh[:, 2 * H:])
        h_new = (1.0 - z) * n + z * h
        q = h_new @ p["fc2_w"].T + p["fc2_b"]
        return h_new, q

    h = hidden0
    qs = []
    for t in range(inputs_seq.shape[0]):
        h, q = step(h, inputs_seq[t])
        qs.append(q)
    return jnp.stack(qs, axis=0), h


if __name__ == "__main__":
    input_shape = 48     # flattened per-agent input feature size
    hidden_dim = 32      # args.rnn_hidden_dim
    T = 8                # rollout length (one module.forward per step)
    B = 1                # module reshapes hidden to (1, H)

    key = jax.random.PRNGKey(0)
    k_in, k_h, k_p, k_bin, k_bh = jax.random.split(key, 5)

    params = init_params(k_p, input_shape, hidden_dim)
    packed = pack_params(params)   # f32 weights (bf16 available for v6e/v7x)

    # --- module-faithful (B = 1) multi-step rollout -------------------------
    inputs_seq = jax.random.normal(k_in, (T, B, input_shape), jnp.float32)
    hidden0 = jax.random.normal(k_h, (B, hidden_dim), jnp.float32)

    q_seq, h_fin = gru_ig_critic_rollout(inputs_seq, hidden0, packed)
    q_seq = jax.block_until_ready(q_seq)
    h_fin = jax.block_until_ready(h_fin)

    q_ref, h_ref = _reference_rollout(inputs_seq, hidden0, params)
    assert q_seq.shape == (T, B, 1) and h_fin.shape == (B, hidden_dim)
    assert jnp.allclose(q_seq, q_ref, atol=1e-4), "q mismatch vs reference"
    assert jnp.allclose(h_fin, h_ref, atol=1e-4), "h mismatch vs reference"

    # --- batched rollout (independent agents sharing weights) ---------------
    Bb = 4
    xb = jax.random.normal(k_bin, (T, Bb, input_shape), jnp.float32)
    hb = jax.random.normal(k_bh, (Bb, hidden_dim), jnp.float32)
    qb, hbf = gru_ig_critic_rollout(xb, hb, packed)
    qb = jax.block_until_ready(qb)
    qb_ref, hb_ref = _reference_rollout(xb, hb, params)
    assert qb.shape == (T, Bb, 1) and hbf.shape == (Bb, hidden_dim)
    assert jnp.allclose(qb, qb_ref, atol=1e-4), "batched q mismatch"
    assert jnp.allclose(hbf, hb_ref, atol=1e-4), "batched h mismatch"

    # --- exact single-step parity with the module's forward signature -------
    q1, h1 = gru_ig_critic_forward(inputs_seq[0], hidden0, packed)
    q1 = jax.block_until_ready(q1)
    q1_ref, h1_ref = _reference_rollout(inputs_seq[:1], hidden0, params)
    assert q1.shape == (1, 1) and h1.shape == (1, hidden_dim)
    assert jnp.allclose(q1, q1_ref[0], atol=1e-4), "single-step q mismatch"
    assert jnp.allclose(h1, h1_ref, atol=1e-4), "single-step h mismatch"

    print("KERNEL_OK")
</pallas_src>

<mosaic_0001>
module attributes {stable_mosaic.version = 11 : i64} {
  func.func @_gru_ig_critic_kernel(%arg0: i32, %arg1: memref<8x1x48xf32, #tpu.memory_space<vmem>>, %arg2: memref<1x32xf32, #tpu.memory_space<vmem>>, %arg3: memref<48x32xf32, #tpu.memory_space<vmem>>, %arg4: memref<1x32xf32, #tpu.memory_space<vmem>>, %arg5: memref<64x128xf32, #tpu.memory_space<vmem>>, %arg6: memref<1x128xf32, #tpu.memory_space<vmem>>, %arg7: memref<1x32xf32, #tpu.memory_space<vmem>>, %arg8: memref<1x1xf32, #tpu.memory_space<vmem>>, %arg9: memref<1x128xf32, #tpu.memory_space<vmem>>, %arg10: memref<1x32xf32, #tpu.memory_space<vmem>>) attributes {dimension_semantics = [#tpu.dimension_semantics<parallel>], iteration_bounds = array<i64: 1>, scalar_prefetch = 0 : i64, scratch_operands = 0 : i64, tpu.core_type = #tpu.core_type<tc>, window_params = [{transform_indices = @transform_0, window_bounds = array<i64: 8, 1, 48>}, {transform_indices = @transform_1, window_bounds = array<i64: 1, 32>}, {pipeline_mode = #tpu.pipeline_mode<synchronous>, transform_indices = @transform_2, window_bounds = array<i64: 48, 32>}, {pipeline_mode = #tpu.pipeline_mode<synchronous>, transform_indices = @transform_3, window_bounds = array<i64: 1, 32>}, {pipeline_mode = #tpu.pipeline_mode<synchronous>, transform_indices = @transform_4, window_bounds = array<i64: 64, 128>}, {pipeline_mode = #tpu.pipeline_mode<synchronous>, transform_indices = @transform_5, window_bounds = array<i64: 1, 128>}, {pipeline_mode = #tpu.pipeline_mode<synchronous>, transform_indices = @transform_6, window_bounds = array<i64: 1, 32>}, {pipeline_mode = #tpu.pipeline_mode<synchronous>, transform_indices = @transform_7, window_bounds = array<i64: 1, 1>}, {transform_indices = @transform_8, window_bounds = array<i64: 1, 128>}, {transform_indices = @transform_9, window_bounds = array<i64: 1, 32>}]} {
    %c0 = arith.constant 0 : index
    %c0_0 = arith.constant 0 : index
    %0 = vector.load %arg3[%c0, %c0_0] : memref<48x32xf32, #tpu.memory_space<vmem>>, vector<48x32xf32>
    %c0_1 = arith.constant 0 : index
    %c0_2 = arith.constant 0 : index
    %1 = vector.load %arg4[%c0_1, %c0_2] : memref<1x32xf32, #tpu.memory_space<vmem>>, vector<1x32xf32>
    %c0_3 = arith.constant 0 : index
    %c0_4 = arith.constant 0 : index
    %2 = vector.load %arg5[%c0_3, %c0_4] : memref<64x128xf32, #tpu.memory_space<vmem>>, vector<64x128xf32>
    %3 = vector.extract_strided_slice %2 {offsets = [0, 0], sizes = [32, 128], strides = [1, 1]} : vector<64x128xf32> to vector<32x128xf32>
    %4 = vector.extract_strided_slice %2 {offsets = [32, 0], sizes = [32, 128], strides = [1, 1]} : vector<64x128xf32> to vector<32x128xf32>
    %c0_5 = arith.constant 0 : index
    %c0_6 = arith.constant 0 : index
    %5 = vector.load %arg6[%c0_5, %c0_6] : memref<1x128xf32, #tpu.memory_space<vmem>>, vector<1x128xf32>
    %c0_7 = arith.constant 0 : index
    %c0_8 = arith.constant 0 : index
    %6 = vector.load %arg7[%c0_7, %c0_8] : memref<1x32xf32, #tpu.memory_space<vmem>>, vector<1x32xf32>
    %c0_9 = arith.constant 0 : index
    %c0_10 = arith.constant 0 : index
    %7 = vector.load %arg8[%c0_9, %c0_10] : memref<1x1xf32, #tpu.memory_space<vmem>>, vector<1x1xf32>
    %8 = tpu.iota {dimensions = array<i32: 1>} : vector<1x128xi32>
    %c0_11 = arith.constant 0 : index
    %c0_12 = arith.constant 0 : index
    %9 = vector.load %arg2[%c0_11, %c0_12] : memref<1x32xf32, #tpu.memory_space<vmem>>, vector<1x32xf32>
    %cst = arith.constant 0.000000e+00 : f32
    %10 = vector.broadcast %cst : f32 to vector<1x128xf32>
    %c0_i32 = arith.constant 0 : i32
    %11 = arith.index_cast %c0_i32 : i32 to index
    %c0_13 = arith.constant 0 : index
    %c0_14 = arith.constant 0 : index
    %12 = vector.load %arg1[%11, %c0_13, %c0_14] : memref<8x1x48xf32, #tpu.memory_space<vmem>>, vector<1x1x48xf32>
    %13 = vector.shape_cast %12 : vector<1x1x48xf32> to vector<1x48xf32>
    %cst_15 = arith.constant dense<0.000000e+00> : vector<1x32xf32>
    %14 = tpu.matmul %13, %0, %cst_15 {dimension_numbers = #tpu.dot_dimension_numbers<[1], [0], [0], [1], [0, 0, 1, 1], [], []>} : vector<1x48xf32>, vector<48x32xf32>, vector<1x32xf32> -> vector<1x32xf32>
    %15 = arith.addf %14, %1 : vector<1x32xf32>
    %cst_16 = arith.constant 0.000000e+00 : f32
    %16 = vector.broadcast %cst_16 : f32 to vector<1x32xf32>
    %17 = arith.maximumf %15, %16 : vector<1x32xf32>
    %cst_17 = arith.constant dense<0.000000e+00> : vector<1x128xf32>
    %18 = tpu.matmul %17, %3, %cst_17 {dimension_numbers = #tpu.dot_dimension_numbers<[1], [0], [0], [1], [0, 0, 1, 1], [], []>} : vector<1x32xf32>, vector<32x128xf32>, vector<1x128xf32> -> vector<1x128xf32>
    %cst_18 = arith.constant dense<0.000000e+00> : vector<1x128xf32>
    %19 = tpu.matmul %9, %4, %cst_18 {dimension_numbers = #tpu.dot_dimension_numbers<[1], [0], [0], [1], [0, 0, 1, 1], [], []>} : vector<1x32xf32>, vector<32x128xf32>, vector<1x128xf32> -> vector<1x128xf32>
    %20 = arith.addf %18, %19 : vector<1x128xf32>
    %21 = arith.addf %20, %5 : vector<1x128xf32>
    %22 = vector.extract_strided_slice %21 {offsets = [0, 0], sizes = [1, 32], strides = [1, 1]} : vector<1x128xf32> to vector<1x32xf32>
    %23 = arith.negf %22 : vector<1x32xf32>
    %24 = math.exp %23 : vector<1x32xf32>
    %cst_19 = arith.constant 1.000000e+00 : f32
    %25 = vector.broadcast %cst_19 : f32 to vector<1x32xf32>
    %26 = arith.addf %25, %24 : vector<1x32xf32>
    %27 = arith.divf %25, %26 : vector<1x32xf32>
    %28 = vector.extract_strided_slice %21 {offsets = [0, 32], sizes = [1, 32], strides = [1, 1]} : vector<1x128xf32> to vector<1x32xf32>
    %29 = arith.negf %28 : vector<1x32xf32>
    %30 = math.exp %29 : vector<1x32xf32>
    %cst_20 = arith.constant 1.000000e+00 : f32
    %31 = vector.broadcast %cst_20 : f32 to vector<1x32xf32>
    %32 = arith.addf %31, %30 : vector<1x32xf32>
    %33 = arith.divf %31, %32 : vector<1x32xf32>
    %34 = vector.extract_strided_slice %21 {offsets = [0, 64], sizes = [1, 32], strides = [1, 1]} : vector<1x128xf32> to vector<1x32xf32>
    %35 = vector.extract_strided_slice %21 {offsets = [0, 96], sizes = [1, 32], strides = [1, 1]} : vector<1x128xf32> to vector<1x32xf32>
    %36 = arith.mulf %27, %35 : vector<1x32xf32>
    %37 = arith.addf %34, %36 : vector<1x32xf32>
    %38 = math.tanh %37 : vector<1x32xf32>
    %cst_21 = arith.constant 1.000000e+00 : f32
    %39 = vector.broadcast %cst_21 : f32 to vector<1x32xf32>
    %40 = arith.subf %39, %33 : vector<1x32xf32>
    %41 = arith.mulf %40, %38 : vector<1x32xf32>
    %42 = arith.mulf %33, %9 : vector<1x32xf32>
    %43 = arith.addf %41, %42 : vector<1x32xf32>
    %44 = arith.mulf %43, %6 : vector<1x32xf32>
    %cst_22 = arith.constant dense<0.000000e+00> : vector<1xf32>
    %45 = vector.multi_reduction <add>, %44, %cst_22 [1] : vector<1x32xf32> to vector<1xf32>
    %46 = vector.shape_cast %45 : vector<1xf32> to vector<1x1xf32>
    %47 = arith.addf %46, %7 : vector<1x1xf32>
    %48 = vector.broadcast %c0_i32 : i32 to vector<1x128xi32>
    %49 = arith.cmpi eq, %8, %48 : vector<1x128xi32>
    %50 = vector.shape_cast %47 : vector<1x1xf32> to vector<1x1xf32>
    %51 = vector.broadcast %50 : vector<1x1xf32> to vector<1x128xf32>
    %52 = arith.select %49, %51, %10 : vector<1x128xi1>, vector<1x128xf32>
    %c1_i32 = arith.constant 1 : i32
    %53 = arith.index_cast %c1_i32 : i32 to index
    %c0_23 = arith.constant 0 : index
    %c0_24 = arith.constant 0 : index
    %54 = vector.load %arg1[%53, %c0_23, %c0_24] : memref<8x1x48xf32, #tpu.memory_space<vmem>>, vector<1x1x48xf32>
    %55 = vector.shape_cast %54 : vector<1x1x48xf32> to vector<1x48xf32>
    %cst_25 = arith.constant dense<0.000000e+00> : vector<1x32xf32>
    %56 = tpu.matmul %55, %0, %cst_25 {dimension_numbers = #tpu.dot_dimension_numbers<[1], [0], [0], [1], [0, 0, 1, 1], [], []>} : vector<1x48xf32>, vector<48x32xf32>, vector<1x32xf32> -> vector<1x32xf32>
    %57 = arith.addf %56, %1 : vector<1x32xf32>
    %cst_26 = arith.constant 0.000000e+00 : f32
    %58 = vector.broadcast %cst_26 : f32 to vector<1x32xf32>
    %59 = arith.maximumf %57, %58 : vector<1x32xf32>
    %cst_27 = arith.constant dense<0.000000e+00> : vector<1x128xf32>
    %60 = tpu.matmul %59, %3, %cst_27 {dimension_numbers = #tpu.dot_dimension_numbers<[1], [0], [0], [1], [0, 0, 1, 1], [], []>} : vector<1x32xf32>, vector<32x128xf32>, vector<1x128xf32> -> vector<1x128xf32>
    %cst_28 = arith.constant dense<0.000000e+00> : vector<1x128xf32>
    %61 = tpu.matmul %43, %4, %cst_28 {dimension_numbers = #tpu.dot_dimension_numbers<[1], [0], [0], [1], [0, 0, 1, 1], [], []>} : vector<1x32xf32>, vector<32x128xf32>, vector<1x128xf32> -> vector<1x128xf32>
    %62 = arith.addf %60, %61 : vector<1x128xf32>
    %63 = arith.addf %62, %5 : vector<1x128xf32>
    %64 = vector.extract_strided_slice %63 {offsets = [0, 0], sizes = [1, 32], strides = [1, 1]} : vector<1x128xf32> to vector<1x32xf32>
    %65 = arith.negf %64 : vector<1x32xf32>
    %66 = math.exp %65 : vector<1x32xf32>
    %cst_29 = arith.constant 1.000000e+00 : f32
    %67 = vector.broadcast %cst_29 : f32 to vector<1x32xf32>
    %68 = arith.addf %67, %66 : vector<1x32xf32>
    %69 = arith.divf %67, %68 : vector<1x32xf32>
    %70 = vector.extract_strided_slice %63 {offsets = [0, 32], sizes = [1, 32], strides = [1, 1]} : vector<1x128xf32> to vector<1x32xf32>
    %71 = arith.negf %70 : vector<1x32xf32>
    %72 = math.exp %71 : vector<1x32xf32>
    %cst_30 = arith.constant 1.000000e+00 : f32
    %73 = vector.broadcast %cst_30 : f32 to vector<1x32xf32>
    %74 = arith.addf %73, %72 : vector<1x32xf32>
    %75 = arith.divf %73, %74 : vector<1x32xf32>
    %76 = vector.extract_strided_slice %63 {offsets = [0, 64], sizes = [1, 32], strides = [1, 1]} : vector<1x128xf32> to vector<1x32xf32>
    %77 = vector.extract_strided_slice %63 {offsets = [0, 96], sizes = [1, 32], strides = [1, 1]} : vector<1x128xf32> to vector<1x32xf32>
    %78 = arith.mulf %69, %77 : vector<1x32xf32>
    %79 = arith.addf %76, %78 : vector<1x32xf32>
    %80 = math.tanh %79 : vector<1x32xf32>
    %cst_31 = arith.constant 1.000000e+00 : f32
    %81 = vector.broadcast %cst_31 : f32 to vector<1x32xf32>
    %82 = arith.subf %81, %75 : vector<1x32xf32>
    %83 = arith.mulf %82, %80 : vector<1x32xf32>
    %84 = arith.mulf %75, %43 : vector<1x32xf32>
    %85 = arith.addf %83, %84 : vector<1x32xf32>
    %86 = arith.mulf %85, %6 : vector<1x32xf32>
    %cst_32 = arith.constant dense<0.000000e+00> : vector<1xf32>
    %87 = vector.multi_reduction <add>, %86, %cst_32 [1] : vector<1x32xf32> to vector<1xf32>
    %88 = vector.shape_cast %87 : vector<1xf32> to vector<1x1xf32>
    %89 = arith.addf %88, %7 : vector<1x1xf32>
    %90 = vector.broadcast %c1_i32 : i32 to vector<1x128xi32>
    %91 = arith.cmpi eq, %8, %90 : vector<1x128xi32>
    %92 = vector.shape_cast %89 : vector<1x1xf32> to vector<1x1xf32>
    %93 = vector.broadcast %92 : vector<1x1xf32> to vector<1x128xf32>
    %94 = arith.select %91, %93, %52 : vector<1x128xi1>, vector<1x128xf32>
    %c2_i32 = arith.constant 2 : i32
    %95 = arith.index_cast %c2_i32 : i32 to index
    %c0_33 = arith.constant 0 : index
    %c0_34 = arith.constant 0 : index
    %96 = vector.load %arg1[%95, %c0_33, %c0_34] : memref<8x1x48xf32, #tpu.memory_space<vmem>>, vector<1x1x48xf32>
    %97 = vector.shape_cast %96 : vector<1x1x48xf32> to vector<1x48xf32>
    %cst_35 = arith.constant dense<0.000000e+00> : vector<1x32xf32>
    %98 = tpu.matmul %97, %0, %cst_35 {dimension_numbers = #tpu.dot_dimension_numbers<[1], [0], [0], [1], [0, 0, 1, 1], [], []>} : vector<1x48xf32>, vector<48x32xf32>, vector<1x32xf32> -> vector<1x32xf32>
    %99 = arith.addf %98, %1 : vector<1x32xf32>
    %cst_36 = arith.constant 0.000000e+00 : f32
    %100 = vector.broadcast %cst_36 : f32 to vector<1x32xf32>
    %101 = arith.maximumf %99, %100 : vector<1x32xf32>
    %cst_37 = arith.constant dense<0.000000e+00> : vector<1x128xf32>
    %102 = tpu.matmul %101, %3, %cst_37 {dimension_numbers = #tpu.dot_dimension_numbers<[1], [0], [0], [1], [0, 0, 1, 1], [], []>} : vector<1x32xf32>, vector<32x128xf32>, vector<1x128xf32> -> vector<1x128xf32>
    %cst_38 = arith.constant dense<0.000000e+00> : vector<1x128xf32>
    %103 = tpu.matmul %85, %4, %cst_38 {dimension_numbers = #tpu.dot_dimension_numbers<[1], [0], [0], [1], [0, 0, 1, 1], [], []>} : vector<1x32xf32>, vector<32x128xf32>, vector<1x128xf32> -> vector<1x128xf32>
    %104 = arith.addf %102, %103 : vector<1x128xf32>
    %105 = arith.addf %104, %5 : vector<1x128xf32>
    %106 = vector.extract_strided_slice %105 {offsets = [0, 0], sizes = [1, 32], strides = [1, 1]} : vector<1x128xf32> to vector<1x32xf32>
    %107 = arith.negf %106 : vector<1x32xf32>
    %108 = math.exp %107 : vector<1x32xf32>
    %cst_39 = arith.constant 1.000000e+00 : f32
    %109 = vector.broadcast %cst_39 : f32 to vector<1x32xf32>
    %110 = arith.addf %109, %108 : vector<1x32xf32>
    %111 = arith.divf %109, %110 : vector<1x32xf32>
    %112 = vector.extract_strided_slice %105 {offsets = [0, 32], sizes = [1, 32], strides = [1, 1]} : vector<1x128xf32> to vector<1x32xf32>
    %113 = arith.negf %112 : vector<1x32xf32>
    %114 = math.exp %113 : vector<1x32xf32>
    %cst_40 = arith.constant 1.000000e+00 : f32
    %115 = vector.broadcast %cst_40 : f32 to vector<1x32xf32>
    %116 = arith.addf %115, %114 : vector<1x32xf32>
    %117 = arith.divf %115, %116 : vector<1x32xf32>
    %118 = vector.extract_strided_slice %105 {offsets = [0, 64], sizes = [1, 32], strides = [1, 1]} : vector<1x128xf32> to vector<1x32xf32>
    %119 = vector.extract_strided_slice %105 {offsets = [0, 96], sizes = [1, 32], strides = [1, 1]} : vector<1x128xf32> to vector<1x32xf32>
    %120 = arith.mulf %111, %119 : vector<1x32xf32>
    %121 = arith.addf %118, %120 : vector<1x32xf32>
    %122 = math.tanh %121 : vector<1x32xf32>
    %cst_41 = arith.constant 1.000000e+00 : f32
    %123 = vector.broadcast %cst_41 : f32 to vector<1x32xf32>
    %124 = arith.subf %123, %117 : vector<1x32xf32>
    %125 = arith.mulf %124, %122 : vector<1x32xf32>
    %126 = arith.mulf %117, %85 : vector<1x32xf32>
    %127 = arith.addf %125, %126 : vector<1x32xf32>
    %128 = arith.mulf %127, %6 : vector<1x32xf32>
    %cst_42 = arith.constant dense<0.000000e+00> : vector<1xf32>
    %129 = vector.multi_reduction <add>, %128, %cst_42 [1] : vector<1x32xf32> to vector<1xf32>
    %130 = vector.shape_cast %129 : vector<1xf32> to vector<1x1xf32>
    %131 = arith.addf %130, %7 : vector<1x1xf32>
    %132 = vector.broadcast %c2_i32 : i32 to vector<1x128xi32>
    %133 = arith.cmpi eq, %8, %132 : vector<1x128xi32>
    %134 = vector.shape_cast %131 : vector<1x1xf32> to vector<1x1xf32>
    %135 = vector.broadcast %134 : vector<1x1xf32> to vector<1x128xf32>
    %136 = arith.select %133, %135, %94 : vector<1x128xi1>, vector<1x128xf32>
    %c3_i32 = arith.constant 3 : i32
    %137 = arith.index_cast %c3_i32 : i32 to index
    %c0_43 = arith.constant 0 : index
    %c0_44 = arith.constant 0 : index
    %138 = vector.load %arg1[%137, %c0_43, %c0_44] : memref<8x1x48xf32, #tpu.memory_space<vmem>>, vector<1x1x48xf32>
    %139 = vector.shape_cast %138 : vector<1x1x48xf32> to vector<1x48xf32>
    %cst_45 = arith.constant dense<0.000000e+00> : vector<1x32xf32>
    %140 = tpu.matmul %139, %0, %cst_45 {dimension_numbers = #tpu.dot_dimension_numbers<[1], [0], [0], [1], [0, 0, 1, 1], [], []>} : vector<1x48xf32>, vector<48x32xf32>, vector<1x32xf32> -> vector<1x32xf32>
    %141 = arith.addf %140, %1 : vector<1x32xf32>
    %cst_46 = arith.constant 0.000000e+00 : f32
    %142 = vector.broadcast %cst_46 : f32 to vector<1x32xf32>
    %143 = arith.maximumf %141, %142 : vector<1x32xf32>
    %cst_47 = arith.constant dense<0.000000e+00> : vector<1x128xf32>
    %144 = tpu.matmul %143, %3, %cst_47 {dimension_numbers = #tpu.dot_dimension_numbers<[1], [0], [0], [1], [0, 0, 1, 1], [], []>} : vector<1x32xf32>, vector<32x128xf32>, vector<1x128xf32> -> vector<1x128xf32>
    %cst_48 = arith.constant dense<0.000000e+00> : vector<1x128xf32>
    %145 = tpu.matmul %127, %4, %cst_48 {dimension_numbers = #tpu.dot_dimension_numbers<[1], [0], [0], [1], [0, 0, 1, 1], [], []>} : vector<1x32xf32>, vector<32x128xf32>, vector<1x128xf32> -> vector<1x128xf32>
    %146 = arith.addf %144, %145 : vector<1x128xf32>
    %147 = arith.addf %146, %5 : vector<1x128xf32>
    %148 = vector.extract_strided_slice %147 {offsets = [0, 0], sizes = [1, 32], strides = [1, 1]} : vector<1x128xf32> to vector<1x32xf32>
    %149 = arith.negf %148 : vector<1x32xf32>
    %150 = math.exp %149 : vector<1x32xf32>
    %cst_49 = arith.constant 1.000000e+00 : f32
    %151 = vector.broadcast %cst_49 : f32 to vector<1x32xf32>
    %152 = arith.addf %151, %150 : vector<1x32xf32>
    %153 = arith.divf %151, %152 : vector<1x32xf32>
    %154 = vector.extract_strided_slice %147 {offsets = [0, 32], sizes = [1, 32], strides = [1, 1]} : vector<1x128xf32> to vector<1x32xf32>
    %155 = arith.negf %154 : vector<1x32xf32>
    %156 = math.exp %155 : vector<1x32xf32>
    %cst_50 = arith.constant 1.000000e+00 : f32
    %157 = vector.broadcast %cst_50 : f32 to vector<1x32xf32>
    %158 = arith.addf %157, %156 : vector<1x32xf32>
    %159 = arith.divf %157, %158 : vector<1x32xf32>
    %160 = vector.extract_strided_slice %147 {offsets = [0, 64], sizes = [1, 32], strides = [1, 1]} : vector<1x128xf32> to vector<1x32xf32>
    %161 = vector.extract_strided_slice %147 {offsets = [0, 96], sizes = [1, 32], strides = [1, 1]} : vector<1x128xf32> to vector<1x32xf32>
    %162 = arith.mulf %153, %161 : vector<1x32xf32>
    %163 = arith.addf %160, %162 : vector<1x32xf32>
    %164 = math.tanh %163 : vector<1x32xf32>
    %cst_51 = arith.constant 1.000000e+00 : f32
    %165 = vector.broadcast %cst_51 : f32 to vector<1x32xf32>
    %166 = arith.subf %165, %159 : vector<1x32xf32>
    %167 = arith.mulf %166, %164 : vector<1x32xf32>
    %168 = arith.mulf %159, %127 : vector<1x32xf32>
    %169 = arith.addf %167, %168 : vector<1x32xf32>
    %170 = arith.mulf %169, %6 : vector<1x32xf32>
    %cst_52 = arith.constant dense<0.000000e+00> : vector<1xf32>
    %171 = vector.multi_reduction <add>, %170, %cst_52 [1] : vector<1x32xf32> to vector<1xf32>
    %172 = vector.shape_cast %171 : vector<1xf32> to vector<1x1xf32>
    %173 = arith.addf %172, %7 : vector<1x1xf32>
    %174 = vector.broadcast %c3_i32 : i32 to vector<1x128xi32>
    %175 = arith.cmpi eq, %8, %174 : vector<1x128xi32>
    %176 = vector.shape_cast %173 : vector<1x1xf32> to vector<1x1xf32>
    %177 = vector.broadcast %176 : vector<1x1xf32> to vector<1x128xf32>
    %178 = arith.select %175, %177, %136 : vector<1x128xi1>, vector<1x128xf32>
    %c4_i32 = arith.constant 4 : i32
    %179 = arith.index_cast %c4_i32 : i32 to index
    %c0_53 = arith.constant 0 : index
    %c0_54 = arith.constant 0 : index
    %180 = vector.load %arg1[%179, %c0_53, %c0_54] : memref<8x1x48xf32, #tpu.memory_space<vmem>>, vector<1x1x48xf32>
    %181 = vector.shape_cast %180 : vector<1x1x48xf32> to vector<1x48xf32>
    %cst_55 = arith.constant dense<0.000000e+00> : vector<1x32xf32>
    %182 = tpu.matmul %181, %0, %cst_55 {dimension_numbers = #tpu.dot_dimension_numbers<[1], [0], [0], [1], [0, 0, 1, 1], [], []>} : vector<1x48xf32>, vector<48x32xf32>, vector<1x32xf32> -> vector<1x32xf32>
    %183 = arith.addf %182, %1 : vector<1x32xf32>
    %cst_56 = arith.constant 0.000000e+00 : f32
    %184 = vector.broadcast %cst_56 : f32 to vector<1x32xf32>
    %185 = arith.maximumf %183, %184 : vector<1x32xf32>
    %cst_57 = arith.constant dense<0.000000e+00> : vector<1x128xf32>
    %186 = tpu.matmul %185, %3, %cst_57 {dimension_numbers = #tpu.dot_dimension_numbers<[1], [0], [0], [1], [0, 0, 1, 1], [], []>} : vector<1x32xf32>, vector<32x128xf32>, vector<1x128xf32> -> vector<1x128xf32>
    %cst_58 = arith.constant dense<0.000000e+00> : vector<1x128xf32>
    %187 = tpu.matmul %169, %4, %cst_58 {dimension_numbers = #tpu.dot_dimension_numbers<[1], [0], [0], [1], [0, 0, 1, 1], [], []>} : vector<1x32xf32>, vector<32x128xf32>, vector<1x128xf32> -> vector<1x128xf32>
    %188 = arith.addf %186, %187 : vector<1x128xf32>
    %189 = arith.addf %188, %5 : vector<1x128xf32>
    %190 = vector.extract_strided_slice %189 {offsets = [0, 0], sizes = [1, 32], strides = [1, 1]} : vector<1x128xf32> to vector<1x32xf32>
    %191 = arith.negf %190 : vector<1x32xf32>
    %192 = math.exp %191 : vector<1x32xf32>
    %cst_59 = arith.constant 1.000000e+00 : f32
    %193 = vector.broadcast %cst_59 : f32 to vector<1x32xf32>
    %194 = arith.addf %193, %192 : vector<1x32xf32>
    %195 = arith.divf %193, %194 : vector<1x32xf32>
    %196 = vector.extract_strided_slice %189 {offsets = [0, 32], sizes = [1, 32], strides = [1, 1]} : vector<1x128xf32> to vector<1x32xf32>
    %197 = arith.negf %196 : vector<1x32xf32>
    %198 = math.exp %197 : vector<1x32xf32>
    %cst_60 = arith.constant 1.000000e+00 : f32
    %199 = vector.broadcast %cst_60 : f32 to vector<1x32xf32>
    %200 = arith.addf %199, %198 : vector<1x32xf32>
    %201 = arith.divf %199, %200 : vector<1x32xf32>
    %202 = vector.extract_strided_slice %189 {offsets = [0, 64], sizes = [1, 32], strides = [1, 1]} : vector<1x128xf32> to vector<1x32xf32>
    %203 = vector.extract_strided_slice %189 {offsets = [0, 96], sizes = [1, 32], strides = [1, 1]} : vector<1x128xf32> to vector<1x32xf32>
    %204 = arith.mulf %195, %203 : vector<1x32xf32>
    %205 = arith.addf %202, %204 : vector<1x32xf32>
    %206 = math.tanh %205 : vector<1x32xf32>
    %cst_61 = arith.constant 1.000000e+00 : f32
    %207 = vector.broadcast %cst_61 : f32 to vector<1x32xf32>
    %208 = arith.subf %207, %201 : vector<1x32xf32>
    %209 = arith.mulf %208, %206 : vector<1x32xf32>
    %210 = arith.mulf %201, %169 : vector<1x32xf32>
    %211 = arith.addf %209, %210 : vector<1x32xf32>
    %212 = arith.mulf %211, %6 : vector<1x32xf32>
    %cst_62 = arith.constant dense<0.000000e+00> : vector<1xf32>
    %213 = vector.multi_reduction <add>, %212, %cst_62 [1] : vector<1x32xf32> to vector<1xf32>
    %214 = vector.shape_cast %213 : vector<1xf32> to vector<1x1xf32>
    %215 = arith.addf %214, %7 : vector<1x1xf32>
    %216 = vector.broadcast %c4_i32 : i32 to vector<1x128xi32>
    %217 = arith.cmpi eq, %8, %216 : vector<1x128xi32>
    %218 = vector.shape_cast %215 : vector<1x1xf32> to vector<1x1xf32>
    %219 = vector.broadcast %218 : vector<1x1xf32> to vector<1x128xf32>
    %220 = arith.select %217, %219, %178 : vector<1x128xi1>, vector<1x128xf32>
    %c5_i32 = arith.constant 5 : i32
    %221 = arith.index_cast %c5_i32 : i32 to index
    %c0_63 = arith.constant 0 : index
    %c0_64 = arith.constant 0 : index
    %222 = vector.load %arg1[%221, %c0_63, %c0_64] : memref<8x1x48xf32, #tpu.memory_space<vmem>>, vector<1x1x48xf32>
    %223 = vector.shape_cast %222 : vector<1x1x48xf32> to vector<1x48xf32>
    %cst_65 = arith.constant dense<0.000000e+00> : vector<1x32xf32>
    %224 = tpu.matmul %223, %0, %cst_65 {dimension_numbers = #tpu.dot_dimension_numbers<[1], [0], [0], [1], [0, 0, 1, 1], [], []>} : vector<1x48xf32>, vector<48x32xf32>, vector<1x32xf32> -> vector<1x32xf32>
    %225 = arith.addf %224, %1 : vector<1x32xf32>
    %cst_66 = arith.constant 0.000000e+00 : f32
    %226 = vector.broadcast %cst_66 : f32 to vector<1x32xf32>
    %227 = arith.maximumf %225, %226 : vector<1x32xf32>
    %cst_67 = arith.constant dense<0.000000e+00> : vector<1x128xf32>
    %228 = tpu.matmul %227, %3, %cst_67 {dimension_numbers = #tpu.dot_dimension_numbers<[1], [0], [0], [1], [0, 0, 1, 1], [], []>} : vector<1x32xf32>, vector<32x128xf32>, vector<1x128xf32> -> vector<1x128xf32>
    %cst_68 = arith.constant dense<0.000000e+00> : vector<1x128xf32>
    %229 = tpu.matmul %211, %4, %cst_68 {dimension_numbers = #tpu.dot_dimension_numbers<[1], [0], [0], [1], [0, 0, 1, 1], [], []>} : vector<1x32xf32>, vector<32x128xf32>, vector<1x128xf32> -> vector<1x128xf32>
    %230 = arith.addf %228, %229 : vector<1x128xf32>
    %231 = arith.addf %230, %5 : vector<1x128xf32>
    %232 = vector.extract_strided_slice %231 {offsets = [0, 0], sizes = [1, 32], strides = [1, 1]} : vector<1x128xf32> to vector<1x32xf32>
    %233 = arith.negf %232 : vector<1x32xf32>
    %234 = math.exp %233 : vector<1x32xf32>
    %cst_69 = arith.constant 1.000000e+00 : f32
    %235 = vector.broadcast %cst_69 : f32 to vector<1x32xf32>
    %236 = arith.addf %235, %234 : vector<1x32xf32>
    %237 = arith.divf %235, %236 : vector<1x32xf32>
    %238 = vector.extract_strided_slice %231 {offsets = [0, 32], sizes = [1, 32], strides = [1, 1]} : vector<1x128xf32> to vector<1x32xf32>
    %239 = arith.negf %238 : vector<1x32xf32>
    %240 = math.exp %239 : vector<1x32xf32>
    %cst_70 = arith.constant 1.000000e+00 : f32
    %241 = vector.broadcast %cst_70 : f32 to vector<1x32xf32>
    %242 = arith.addf %241, %240 : vector<1x32xf32>
    %243 = arith.divf %241, %242 : vector<1x32xf32>
    %244 = vector.extract_strided_slice %231 {offsets = [0, 64], sizes = [1, 32], strides = [1, 1]} : vector<1x128xf32> to vector<1x32xf32>
    %245 = vector.extract_strided_slice %231 {offsets = [0, 96], sizes = [1, 32], strides = [1, 1]} : vector<1x128xf32> to vector<1x32xf32>
    %246 = arith.mulf %237, %245 : vector<1x32xf32>
    %247 = arith.addf %244, %246 : vector<1x32xf32>
    %248 = math.tanh %247 : vector<1x32xf32>
    %cst_71 = arith.constant 1.000000e+00 : f32
    %249 = vector.broadcast %cst_71 : f32 to vector<1x32xf32>
    %250 = arith.subf %249, %243 : vector<1x32xf32>
    %251 = arith.mulf %250, %248 : vector<1x32xf32>
    %252 = arith.mulf %243, %211 : vector<1x32xf32>
    %253 = arith.addf %251, %252 : vector<1x32xf32>
    %254 = arith.mulf %253, %6 : vector<1x32xf32>
    %cst_72 = arith.constant dense<0.000000e+00> : vector<1xf32>
    %255 = vector.multi_reduction <add>, %254, %cst_72 [1] : vector<1x32xf32> to vector<1xf32>
    %256 = vector.shape_cast %255 : vector<1xf32> to vector<1x1xf32>
    %257 = arith.addf %256, %7 : vector<1x1xf32>
    %258 = vector.broadcast %c5_i32 : i32 to vector<1x128xi32>
    %259 = arith.cmpi eq, %8, %258 : vector<1x128xi32>
    %260 = vector.shape_cast %257 : vector<1x1xf32> to vector<1x1xf32>
    %261 = vector.broadcast %260 : vector<1x1xf32> to vector<1x128xf32>
    %262 = arith.select %259, %261, %220 : vector<1x128xi1>, vector<1x128xf32>
    %c6_i32 = arith.constant 6 : i32
    %263 = arith.index_cast %c6_i32 : i32 to index
    %c0_73 = arith.constant 0 : index
    %c0_74 = arith.constant 0 : index
    %264 = vector.load %arg1[%263, %c0_73, %c0_74] : memref<8x1x48xf32, #tpu.memory_space<vmem>>, vector<1x1x48xf32>
    %265 = vector.shape_cast %264 : vector<1x1x48xf32> to vector<1x48xf32>
    %cst_75 = arith.constant dense<0.000000e+00> : vector<1x32xf32>
    %266 = tpu.matmul %265, %0, %cst_75 {dimension_numbers = #tpu.dot_dimension_numbers<[1], [0], [0], [1], [0, 0, 1, 1], [], []>} : vector<1x48xf32>, vector<48x32xf32>, vector<1x32xf32> -> vector<1x32xf32>
    %267 = arith.addf %266, %1 : vector<1x32xf32>
    %cst_76 = arith.constant 0.000000e+00 : f32
    %268 = vector.broadcast %cst_76 : f32 to vector<1x32xf32>
    %269 = arith.maximumf %267, %268 : vector<1x32xf32>
    %cst_77 = arith.constant dense<0.000000e+00> : vector<1x128xf32>
    %270 = tpu.matmul %269, %3, %cst_77 {dimension_numbers = #tpu.dot_dimension_numbers<[1], [0], [0], [1], [0, 0, 1, 1], [], []>} : vector<1x32xf32>, vector<32x128xf32>, vector<1x128xf32> -> vector<1x128xf32>
    %cst_78 = arith.constant dense<0.000000e+00> : vector<1x128xf32>
    %271 = tpu.matmul %253, %4, %cst_78 {dimension_numbers = #tpu.dot_dimension_numbers<[1], [0], [0], [1], [0, 0, 1, 1], [], []>} : vector<1x32xf32>, vector<32x128xf32>, vector<1x128xf32> -> vector<1x128xf32>
    %272 = arith.addf %270, %271 : vector<1x128xf32>
    %273 = arith.addf %272, %5 : vector<1x128xf32>
    %274 = vector.extract_strided_slice %273 {offsets = [0, 0], sizes = [1, 32], strides = [1, 1]} : vector<1x128xf32> to vector<1x32xf32>
    %275 = arith.negf %274 : vector<1x32xf32>
    %276 = math.exp %275 : vector<1x32xf32>
    %cst_79 = arith.constant 1.000000e+00 : f32
    %277 = vector.broadcast %cst_79 : f32 to vector<1x32xf32>
    %278 = arith.addf %277, %276 : vector<1x32xf32>
    %279 = arith.divf %277, %278 : vector<1x32xf32>
    %280 = vector.extract_strided_slice %273 {offsets = [0, 32], sizes = [1, 32], strides = [1, 1]} : vector<1x128xf32> to vector<1x32xf32>
    %281 = arith.negf %280 : vector<1x32xf32>
    %282 = math.exp %281 : vector<1x32xf32>
    %cst_80 = arith.constant 1.000000e+00 : f32
    %283 = vector.broadcast %cst_80 : f32 to vector<1x32xf32>
    %284 = arith.addf %283, %282 : vector<1x32xf32>
    %285 = arith.divf %283, %284 : vector<1x32xf32>
    %286 = vector.extract_strided_slice %273 {offsets = [0, 64], sizes = [1, 32], strides = [1, 1]} : vector<1x128xf32> to vector<1x32xf32>
    %287 = vector.extract_strided_slice %273 {offsets = [0, 96], sizes = [1, 32], strides = [1, 1]} : vector<1x128xf32> to vector<1x32xf32>
    %288 = arith.mulf %279, %287 : vector<1x32xf32>
    %289 = arith.addf %286, %288 : vector<1x32xf32>
    %290 = math.tanh %289 : vector<1x32xf32>
    %cst_81 = arith.constant 1.000000e+00 : f32
    %291 = vector.broadcast %cst_81 : f32 to vector<1x32xf32>
    %292 = arith.subf %291, %285 : vector<1x32xf32>
    %293 = arith.mulf %292, %290 : vector<1x32xf32>
    %294 = arith.mulf %285, %253 : vector<1x32xf32>
    %295 = arith.addf %293, %294 : vector<1x32xf32>
    %296 = arith.mulf %295, %6 : vector<1x32xf32>
    %cst_82 = arith.constant dense<0.000000e+00> : vector<1xf32>
    %297 = vector.multi_reduction <add>, %296, %cst_82 [1] : vector<1x32xf32> to vector<1xf32>
    %298 = vector.shape_cast %297 : vector<1xf32> to vector<1x1xf32>
    %299 = arith.addf %298, %7 : vector<1x1xf32>
    %300 = vector.broadcast %c6_i32 : i32 to vector<1x128xi32>
    %301 = arith.cmpi eq, %8, %300 : vector<1x128xi32>
    %302 = vector.shape_cast %299 : vector<1x1xf32> to vector<1x1xf32>
    %303 = vector.broadcast %302 : vector<1x1xf32> to vector<1x128xf32>
    %304 = arith.select %301, %303, %262 : vector<1x128xi1>, vector<1x128xf32>
    %c7_i32 = arith.constant 7 : i32
    %305 = arith.index_cast %c7_i32 : i32 to index
    %c0_83 = arith.constant 0 : index
    %c0_84 = arith.constant 0 : index
    %306 = vector.load %arg1[%305, %c0_83, %c0_84] : memref<8x1x48xf32, #tpu.memory_space<vmem>>, vector<1x1x48xf32>
    %307 = vector.shape_cast %306 : vector<1x1x48xf32> to vector<1x48xf32>
    %cst_85 = arith.constant dense<0.000000e+00> : vector<1x32xf32>
    %308 = tpu.matmul %307, %0, %cst_85 {dimension_numbers = #tpu.dot_dimension_numbers<[1], [0], [0], [1], [0, 0, 1, 1], [], []>} : vector<1x48xf32>, vector<48x32xf32>, vector<1x32xf32> -> vector<1x32xf32>
    %309 = arith.addf %308, %1 : vector<1x32xf32>
    %cst_86 = arith.constant 0.000000e+00 : f32
    %310 = vector.broadcast %cst_86 : f32 to vector<1x32xf32>
    %311 = arith.maximumf %309, %310 : vector<1x32xf32>
    %cst_87 = arith.constant dense<0.000000e+00> : vector<1x128xf32>
    %312 = tpu.matmul %311, %3, %cst_87 {dimension_numbers = #tpu.dot_dimension_numbers<[1], [0], [0], [1], [0, 0, 1, 1], [], []>} : vector<1x32xf32>, vector<32x128xf32>, vector<1x128xf32> -> vector<1x128xf32>
    %cst_88 = arith.constant dense<0.000000e+00> : vector<1x128xf32>
    %313 = tpu.matmul %295, %4, %cst_88 {dimension_numbers = #tpu.dot_dimension_numbers<[1], [0], [0], [1], [0, 0, 1, 1], [], []>} : vector<1x32xf32>, vector<32x128xf32>, vector<1x128xf32> -> vector<1x128xf32>
    %314 = arith.addf %312, %313 : vector<1x128xf32>
    %315 = arith.addf %314, %5 : vector<1x128xf32>
    %316 = vector.extract_strided_slice %315 {offsets = [0, 0], sizes = [1, 32], strides = [1, 1]} : vector<1x128xf32> to vector<1x32xf32>
    %317 = arith.negf %316 : vector<1x32xf32>
    %318 = math.exp %317 : vector<1x32xf32>
    %cst_89 = arith.constant 1.000000e+00 : f32
    %319 = vector.broadcast %cst_89 : f32 to vector<1x32xf32>
    %320 = arith.addf %319, %318 : vector<1x32xf32>
    %321 = arith.divf %319, %320 : vector<1x32xf32>
    %322 = vector.extract_strided_slice %315 {offsets = [0, 32], sizes = [1, 32], strides = [1, 1]} : vector<1x128xf32> to vector<1x32xf32>
    %323 = arith.negf %322 : vector<1x32xf32>
    %324 = math.exp %323 : vector<1x32xf32>
    %cst_90 = arith.constant 1.000000e+00 : f32
    %325 = vector.broadcast %cst_90 : f32 to vector<1x32xf32>
    %326 = arith.addf %325, %324 : vector<1x32xf32>
    %327 = arith.divf %325, %326 : vector<1x32xf32>
    %328 = vector.extract_strided_slice %315 {offsets = [0, 64], sizes = [1, 32], strides = [1, 1]} : vector<1x128xf32> to vector<1x32xf32>
    %329 = vector.extract_strided_slice %315 {offsets = [0, 96], sizes = [1, 32], strides = [1, 1]} : vector<1x128xf32> to vector<1x32xf32>
    %330 = arith.mulf %321, %329 : vector<1x32xf32>
    %331 = arith.addf %328, %330 : vector<1x32xf32>
    %332 = math.tanh %331 : vector<1x32xf32>
    %cst_91 = arith.constant 1.000000e+00 : f32
    %333 = vector.broadcast %cst_91 : f32 to vector<1x32xf32>
    %334 = arith.subf %333, %327 : vector<1x32xf32>
    %335 = arith.mulf %334, %332 : vector<1x32xf32>
    %336 = arith.mulf %327, %295 : vector<1x32xf32>
    %337 = arith.addf %335, %336 : vector<1x32xf32>
    %338 = arith.mulf %337, %6 : vector<1x32xf32>
    %cst_92 = arith.constant dense<0.000000e+00> : vector<1xf32>
    %339 = vector.multi_reduction <add>, %338, %cst_92 [1] : vector<1x32xf32> to vector<1xf32>
    %340 = vector.shape_cast %339 : vector<1xf32> to vector<1x1xf32>
    %341 = arith.addf %340, %7 : vector<1x1xf32>
    %342 = vector.broadcast %c7_i32 : i32 to vector<1x128xi32>
    %343 = arith.cmpi eq, %8, %342 : vector<1x128xi32>
    %344 = vector.shape_cast %341 : vector<1x1xf32> to vector<1x1xf32>
    %345 = vector.broadcast %344 : vector<1x1xf32> to vector<1x128xf32>
    %346 = arith.select %343, %345, %304 : vector<1x128xi1>, vector<1x128xf32>
    %c8_i32 = arith.constant 8 : i32
    %c0_93 = arith.constant 0 : index
    %c0_94 = arith.constant 0 : index
    %347 = vector.load %arg9[%c0_93, %c0_94] : memref<1x128xf32, #tpu.memory_space<vmem>>, vector<1x128xf32>
    tpu.vector_store %arg9[%c0_93, %c0_94], %346 {strides = array<i32>} : memref<1x128xf32, #tpu.memory_space<vmem>>, vector<1x128xf32>,
    %c0_95 = arith.constant 0 : index
    %c0_96 = arith.constant 0 : index
    %348 = vector.load %arg10[%c0_95, %c0_96] : memref<1x32xf32, #tpu.memory_space<vmem>>, vector<1x32xf32>
    tpu.vector_store %arg10[%c0_95, %c0_96], %337 {strides = array<i32>} : memref<1x32xf32, #tpu.memory_space<vmem>>, vector<1x32xf32>,
    return
  }
  func.func @transform_0(%arg0: i32) -> (i32, i32, i32) {
    %c0_i32 = arith.constant 0 : i32
    %c0_i32_0 = arith.constant 0 : i32
    %c0_i32_1 = arith.constant 0 : i32
    return %c0_i32, %arg0, %c0_i32_0 : i32, i32, i32
  }
  func.func @transform_1(%arg0: i32) -> (i32, i32) {
    %c0_i32 = arith.constant 0 : i32
    %c0_i32_0 = arith.constant 0 : i32
    return %arg0, %c0_i32 : i32, i32
  }
  func.func @transform_2(%arg0: i32) -> (i32, i32) {
    %c0_i32 = arith.constant 0 : i32
    %c0_i32_0 = arith.constant 0 : i32
    %c0_i32_1 = arith.constant 0 : i32
    return %c0_i32, %c0_i32_0 : i32, i32
  }
  func.func @transform_3(%arg0: i32) -> (i32, i32) {
    %c0_i32 = arith.constant 0 : i32
    %c0_i32_0 = arith.constant 0 : i32
    %c0_i32_1 = arith.constant 0 : i32
    return %c0_i32, %c0_i32_0 : i32, i32
  }
  func.func @transform_4(%arg0: i32) -> (i32, i32) {
    %c0_i32 = arith.constant 0 : i32
    %c0_i32_0 = arith.constant 0 : i32
    %c0_i32_1 = arith.constant 0 : i32
    return %c0_i32, %c0_i32_0 : i32, i32
  }
  func.func @transform_5(%arg0: i32) -> (i32, i32) {
    %c0_i32 = arith.constant 0 : i32
    %c0_i32_0 = arith.constant 0 : i32
    %c0_i32_1 = arith.constant 0 : i32
    return %c0_i32, %c0_i32_0 : i32, i32
  }
  func.func @transform_6(%arg0: i32) -> (i32, i32) {
    %c0_i32 = arith.constant 0 : i32
    %c0_i32_0 = arith.constant 0 : i32
    %c0_i32_1 = arith.constant 0 : i32
    return %c0_i32, %c0_i32_0 : i32, i32
  }
  func.func @transform_7(%arg0: i32) -> (i32, i32) {
    %c0_i32 = arith.constant 0 : i32
    %c0_i32_0 = arith.constant 0 : i32
    %c0_i32_1 = arith.constant 0 : i32
    return %c0_i32, %c0_i32_0 : i32, i32
  }
  func.func @transform_8(%arg0: i32) -> (i32, i32) {
    %c0_i32 = arith.constant 0 : i32
    %c0_i32_0 = arith.constant 0 : i32
    return %arg0, %c0_i32 : i32, i32
  }
  func.func @transform_9(%arg0: i32) -> (i32, i32) {
    %c0_i32 = arith.constant 0 : i32
    %c0_i32_0 = arith.constant 0 : i32
    return %arg0, %c0_i32 : i32, i32
  }
}

</mosaic_0001>

<llo_original>
// kernel: tpu_custom_call.1
$region0: #{tpu_custom_call.1}
  #allocation0 [shape = 'u32[]', space=smem, size = 0x4, offset = 0x4, fixed_abs, tag = 'smem constant byte address 0x4 - core index']
  #allocation1 [shape = 'u32[144,128]{1,0:T(1,128)}', space=vmem, size = 0x12000, scoped, tag = 'internal scratch']
  #allocation2 [shape = 'f32[1,1]{1,0:T(1,128)S(1)}', space=vmem, size = 0x200, scoped, tag = 'scoped memory for tpu_custom_call.1']
  %s0 = inlined_call_operand.vmem [shape: f32[8,1,48], index: 0, kind: input, shape index: {}]
  %s1 = inlined_call_operand.vmem [shape: f32[1,32], index: 1, kind: input, shape index: {}]
  %s2 = inlined_call_operand.vmem [shape: f32[48,32], index: 2, kind: input, shape index: {}]
  %s3 = inlined_call_operand.vmem [shape: f32[1,32], index: 3, kind: input, shape index: {}]
  %s4 = inlined_call_operand.vmem [shape: f32[64,128], index: 4, kind: input, shape index: {}]
  %s5 = inlined_call_operand.vmem [shape: f32[1,128], index: 5, kind: input, shape index: {}]
  %s6 = inlined_call_operand.vmem [shape: f32[1,32], index: 6, kind: input, shape index: {}]
  %s7 = inlined_call_operand.<no memory space> [shape: f32[1,1], index: 7, kind: input, shape index: {}]
  %s8 = inlined_call_operand.hbm [shape: f32[1,128], index: 8, kind: output, shape index: {0}]
  %s9 = inlined_call_operand.hbm [shape: f32[1,32], index: 9, kind: output, shape index: {1}]
  %10 = xla_tuple %s8, %s9
  %s11 = sld [smem:[#allocation0]]
  $region50: #{tpu_custom_call.1} parent=0
    _
  %s13 = ssub.s32 1, %s11
  %s14 = scalar_select 0, %s13, %s11
  %v15 = vstv %s7
  %16 = vst [vmem:[#allocation2] sm:$0x1] %v15
  $region1: #{tpu_custom_call.1} parent=0
    #allocation3 [shape = 'u8[512]{0}', space=vmem, size = 0x400, scoped, tag = 'output window, operand 0, single buffered']
    #allocation4 [shape = 's32[1]{0}', space=sflag, size = 0x4, scoped, tag = 'scoped memory for tpu_custom_call.1']
    #allocation5 [shape = 'u8[512]{0}', space=vmem, size = 0x400, scoped, tag = 'output window, operand 1, single buffered']
    #allocation6 [shape = 's32[1]{0}', space=sflag, size = 0x4, scoped, tag = 'scoped memory for tpu_custom_call.1']
    %17 = vsyncpa [#allocation4], 0
    %18 = vsyncpa [#allocation6], 0
    // Predicated region
    $region2: #{tpu_custom_call.1} parent=1 // pred_check
      _
    $region3: #{tpu_custom_call.1} parent=1 // pred_check_branch
      %20 = sbr.rel (0) target = $region5
    $region4: #{tpu_custom_call.1} parent=1 // pred_region
      _
    $region5: #{tpu_custom_call.1} parent=1 // pred_fallthru
      _
    // Predicated region
    $region6: #{tpu_custom_call.1} parent=1 // pred_check
      _
    $region7: #{tpu_custom_call.1} parent=1 // pred_check_branch
      %22 = sbr.rel (0) target = $region9
    $region8: #{tpu_custom_call.1} parent=1 // pred_region
      _
    $region9: #{tpu_custom_call.1} parent=1 // pred_fallthru
      _
    // Predicated region
    $region10: #{tpu_custom_call.1} parent=1 // pred_check
      _
    $region11: #{tpu_custom_call.1} parent=1 // pred_check_branch
      %24 = sbr.rel (0) target = $region13
    $region12: #{tpu_custom_call.1} parent=1 // pred_region
      _
    $region13: #{tpu_custom_call.1} parent=1 // pred_fallthru
      _
    // Predicated region
    $region14: #{tpu_custom_call.1} parent=1 // pred_check
      _
    $region15: #{tpu_custom_call.1} parent=1 // pred_check_branch
      %26 = sbr.rel (0) target = $region17
    $region16: #{tpu_custom_call.1} parent=1 // pred_region
      _
    $region17: #{tpu_custom_call.1} parent=1 // pred_fallthru
      _
    // Predicated region
    $region18: #{tpu_custom_call.1} parent=1 // pred_check
      _
    $region19: #{tpu_custom_call.1} parent=1 // pred_check_branch
      %28 = sbr.rel (0) target = $region21
    $region20: #{tpu_custom_call.1} parent=1 // pred_region
      _
    $region21: #{tpu_custom_call.1} parent=1 // pred_fallthru
      _
    // Predicated region
    $region22: #{tpu_custom_call.1} parent=1 // pred_check
      _
    $region23: #{tpu_custom_call.1} parent=1 // pred_check_branch
      %30 = sbr.rel (0) target = $region25
    $region24: #{tpu_custom_call.1} parent=1 // pred_region
      _
    $region25: #{tpu_custom_call.1} parent=1 // pred_fallthru
      _
    // Predicated region
    $region26: #{tpu_custom_call.1} parent=1 // pred_check
      _
    $region27: #{tpu_custom_call.1} parent=1 // pred_check_branch
      %32 = sbr.rel (0) target = $region29
    $region28: #{tpu_custom_call.1} parent=1 // pred_region
      _
    $region29: #{tpu_custom_call.1} parent=1 // pred_fallthru
      _
    // Predicated region
    $region30: #{tpu_custom_call.1} parent=1 // pred_check
      _
    $region31: #{tpu_custom_call.1} parent=1 // pred_check_branch
      %34 = sbr.rel (0) target = $region33
    $region32: #{tpu_custom_call.1} parent=1 // pred_region
      _
    $region33: #{tpu_custom_call.1} parent=1 // pred_fallthru
      _
    %v35 = vld [vmem:[%s2] sm:$0xff]
    %v36 = vld [vmem:[%s2 + $0x8] sm:$0xff]
    %v37 = vld [vmem:[%s2 + $0x10] sm:$0xff]
    %v38 = vld [vmem:[%s2 + $0x18] sm:$0xff]
    %v39 = vld [vmem:[%s2 + $0x20] sm:$0xff]
    %v40 = vld [vmem:[%s2 + $0x28] sm:$0xff]
    %v41 = vld [vmem:[%s3] sm:$0x1]
    %v42 = vld [vmem:[%s4] sm:$0xff]
    %v43 = vld [vmem:[%s4 + $0x8] sm:$0xff]
    %v44 = vld [vmem:[%s4 + $0x10] sm:$0xff]
    %v45 = vld [vmem:[%s4 + $0x18] sm:$0xff]
    %v46 = vld [vmem:[%s4 + $0x20] sm:$0xff]
    %v47 = vld [vmem:[%s4 + $0x28] sm:$0xff]
    %v48 = vld [vmem:[%s4 + $0x30] sm:$0xff]
    %v49 = vld [vmem:[%s4 + $0x38] sm:$0xff]
    %v50 = vld [vmem:[%s5] sm:$0x1]
    %v51 = vld [vmem:[%s6] sm:$0x1]
    %v52 = vld [vmem:[#allocation2] sm:$0x1]
    %v53 = vlaneseq
    %v54 = vand.u32 %v53, 127
    %v55 = vld [vmem:[%s1] sm:$0x1]
    %v56 = vld [vmem:[%s0] sm:$0x1]
    %vm57 = vcmask 392192
    %v59 = vsel %vm57, %v56, 0
    %61 = vmatprep.subr.mxu0 0.0
    %62 = vmatpush1.msra.mxu0 %v35
    %63 = vmatprep.subr.mxu0 0.0
    %64 = vmatpush1.msra.mxu0 %v36
    %65 = vmatprep.subr.mxu0 0.0
    %66 = vmatpush1.msra.mxu0 %v37
    %67 = vmatprep.subr.mxu0 0.0
    %68 = vmatpush1.msra.mxu0 %v38
    %69 = vmatprep.subr.mxu0 0.0
    %70 = vmatpush1.msra.mxu0 %v39
    %71 = vmatprep.subr.mxu0 0.0
    %72 = vmatpush1.msra.mxu0 %v40
    %73 = vmatprep.subr.mxu0 0.0
    %74 = vmatpush1.msra.mxu0 0.0
    %75 = vmatprep.subr.mxu0 0.0
    %76 = vmatpush1.msra.mxu0 0.0
    %77 = vmatprep.subr.mxu0 0.0
    %78 = vmatpush1.msra.mxu0 0.0
    %79 = vmatprep.subr.mxu0 0.0
    %80 = vmatpush1.msra.mxu0 0.0
    %81 = vmatprep.subr.mxu0 0.0
    %82 = vmatpush1.msra.mxu0 0.0
    %83 = vmatprep.subr.mxu0 0.0
    %84 = vmatpush1.msra.mxu0 0.0
    %85 = vmatprep.subr.mxu0 0.0
    %86 = vmatpush1.msra.mxu0 0.0
    %87 = vmatprep.subr.mxu0 0.0
    %88 = vmatpush1.msra.mxu0 0.0
    %89 = vmatprep.subr.mxu0 0.0
    %90 = vmatpush1.msra.mxu0 0.0
    %91 = vmatprep.subr.mxu0 0.0
    %92 = vmatpush1.msra.mxu0 0.0
    %93 = vmatprep.subr.mxu0 0.0
    %94 = vmatpush1.msra.mxu0 0.0
    %95 = vmatprep.subr.mxu0 0.0
    %96 = vmatpush1.msra.mxu0 0.0
    %97 = vmatprep.subr.mxu0 0.0
    %98 = vmatpush1.msra.mxu0 0.0
    %99 = vmatprep.subr.mxu0 0.0
    %100 = vmatpush1.msra.mxu0 0.0
    %101 = vmatprep.subr.mxu0 0.0
    %102 = vmatpush1.msra.mxu0 0.0
    %103 = vmatprep.subr.mxu0 0.0
    %104 = vmatpush1.msra.mxu0 0.0
    %105 = vmatprep.subr.mxu0 0.0
    %106 = vmatpush1.msra.mxu0 0.0
    %107 = vmatprep.subr.mxu0 0.0
    %108 = vmatpush1.msra.mxu0 0.0
    %109 = vmatprep.subr.mxu0 0.0
    %110 = vmatpush1.msra.mxu0 0.0
    %111 = vmatprep.subr.mxu0 0.0
    %112 = vmatpush1.msra.mxu0 0.0
    %113 = vmatprep.subr.mxu0 0.0
    %114 = vmatpush1.msra.mxu0 0.0
    %115 = vmatprep.subr.mxu0 0.0
    %116 = vmatpush1.msra.mxu0 0.0
    %117 = vmatprep.subr.mxu0 0.0
    %118 = vmatpush1.msra.mxu0 0.0
    %119 = vmatprep.subr.mxu0 0.0
    %120 = vmatpush1.msra.mxu0 0.0
    %121 = vmatprep.subr.mxu0 0.0
    %122 = vmatpush1.msra.mxu0 0.0
    %123 = vmatprep.subr.mxu0 0.0
    %124 = vmatpush1.msra.mxu0 0.0
    %125 = vmatprep.mubr.f32.mxu0 0.0
    %126 = vmatmul.mubr.f32.gmra.mrb[0].mxu0 %v59
    %v127 = vpop.f32.mrb[0].mxu0
    %v128 = vadd.f32 %v41, %v127
    %v129 = vpop.f32.mrb[0].mxu0
    %130 = vdwg.mxu0
    %v131 = vmax.f32 %v128, 0.0
    %vm132 = vcmask 261120
    %v134 = vsel %vm132, %v55, 0
    %136 = vmatprep.subr.mxu0 0.0
    %137 = vmatpush1.msra.mxu0 %v46
    %138 = vmatprep.subr.mxu0 0.0
    %139 = vmatpush1.msra.mxu0 %v47
    %140 = vmatprep.subr.mxu0 0.0
    %141 = vmatpush1.msra.mxu0 %v48
    %142 = vmatprep.subr.mxu0 0.0
    %143 = vmatpush1.msra.mxu0 %v49
    %144 = vmatprep.subr.mxu0 0.0
    %145 = vmatpush1.msra.mxu0 0.0
    %146 = vmatprep.subr.mxu0 0.0
    %147 = vmatpush1.msra.mxu0 0.0
    %148 = vmatprep.subr.mxu0 0.0
    %149 = vmatpush1.msra.mxu0 0.0
    %150 = vmatprep.subr.mxu0 0.0
    %151 = vmatpush1.msra.mxu0 0.0
    %152 = vmatprep.subr.mxu0 0.0
    %153 = vmatpush1.msra.mxu0 0.0
    %154 = vmatprep.subr.mxu0 0.0
    %155 = vmatpush1.msra.mxu0 0.0
    %156 = vmatprep.subr.mxu0 0.0
    %157 = vmatpush1.msra.mxu0 0.0
    %158 = vmatprep.subr.mxu0 0.0
    %159 = vmatpush1.msra.mxu0 0.0
    %160 = vmatprep.subr.mxu0 0.0
    %161 = vmatpush1.msra.mxu0 0.0
    %162 = vmatprep.subr.mxu0 0.0
    %163 = vmatpush1.msra.mxu0 0.0
    %164 = vmatprep.subr.mxu0 0.0
    %165 = vmatpush1.msra.mxu0 0.0
    %166 = vmatprep.subr.mxu0 0.0
    %167 = vmatpush1.msra.mxu0 0.0
    %168 = vmatprep.subr.mxu0 0.0
    %169 = vmatpush1.msra.mxu0 0.0
    %170 = vmatprep.subr.mxu0 0.0
    %171 = vmatpush1.msra.mxu0 0.0
    %172 = vmatprep.subr.mxu0 0.0
    %173 = vmatpush1.msra.mxu0 0.0
    %174 = vmatprep.subr.mxu0 0.0
    %175 = vmatpush1.msra.mxu0 0.0
    %176 = vmatprep.subr.mxu0 0.0
    %177 = vmatpush1.msra.mxu0 0.0
    %178 = vmatprep.subr.mxu0 0.0
    %179 = vmatpush1.msra.mxu0 0.0
    %180 = vmatprep.subr.mxu0 0.0
    %181 = vmatpush1.msra.mxu0 0.0
    %182 = vmatprep.subr.mxu0 0.0
    %183 = vmatpush1.msra.mxu0 0.0
    %184 = vmatprep.subr.mxu0 0.0
    %185 = vmatpush1.msra.mxu0 0.0
    %186 = vmatprep.subr.mxu0 0.0
    %187 = vmatpush1.msra.mxu0 0.0
    %188 = vmatprep.subr.mxu0 0.0
    %189 = vmatpush1.msra.mxu0 0.0
    %190 = vmatprep.subr.mxu0 0.0
    %191 = vmatpush1.msra.mxu0 0.0
    %192 = vmatprep.subr.mxu0 0.0
    %193 = vmatpush1.msra.mxu0 0.0
    %194 = vmatprep.subr.mxu0 0.0
    %195 = vmatpush1.msra.mxu0 0.0
    %196 = vmatprep.subr.mxu0 0.0
    %197 = vmatpush1.msra.mxu0 0.0
    %198 = vmatprep.subr.mxu0 0.0
    %199 = vmatpush1.msra.mxu0 0.0
    %200 = vmatprep.mubr.f32.mxu0 0.0
    %201 = vmatmul.mubr.f32.gmra.mrb[0].mxu0 %v134
    %v202 = vpop.f32.mrb[0].mxu0
    %v203 = vadd.f32 0.0, %v202
    %v204 = vpop.f32.mrb[0].mxu0
    %205 = vdwg.mxu0
    %v207 = vsel %vm132, %v131, 0
    %209 = vmatprep.subr.mxu0 0.0
    %210 = vmatpush1.msra.mxu0 %v42
    %211 = vmatprep.subr.mxu0 0.0
    %212 = vmatpush1.msra.mxu0 %v43
    %213 = vmatprep.subr.mxu0 0.0
    %214 = vmatpush1.msra.mxu0 %v44
    %215 = vmatprep.subr.mxu0 0.0
    %216 = vmatpush1.msra.mxu0 %v45
    %217 = vmatprep.subr.mxu0 0.0
    %218 = vmatpush1.msra.mxu0 0.0
    %219 = vmatprep.subr.mxu0 0.0
    %220 = vmatpush1.msra.mxu0 0.0
    %221 = vmatprep.subr.mxu0 0.0
    %222 = vmatpush1.msra.mxu0 0.0
    %223 = vmatprep.subr.mxu0 0.0
    %224 = vmatpush1.msra.mxu0 0.0
    %225 = vmatprep.subr.mxu0 0.0
    %226 = vmatpush1.msra.mxu0 0.0
    %227 = vmatprep.subr.mxu0 0.0
    %228 = vmatpush1.msra.mxu0 0.0
    %229 = vmatprep.subr.mxu0 0.0
    %230 = vmatpush1.msra.mxu0 0.0
    %231 = vmatprep.subr.mxu0 0.0
    %232 = vmatpush1.msra.mxu0 0.0
    %233 = vmatprep.subr.mxu0 0.0
    %234 = vmatpush1.msra.mxu0 0.0
    %235 = vmatprep.subr.mxu0 0.0
    %236 = vmatpush1.msra.mxu0 0.0
    %237 = vmatprep.subr.mxu0 0.0
    %238 = vmatpush1.msra.mxu0 0.0
    %239 = vmatprep.subr.mxu0 0.0
    %240 = vmatpush1.msra.mxu0 0.0
    %241 = vmatprep.subr.mxu0 0.0
    %242 = vmatpush1.msra.mxu0 0.0
    %243 = vmatprep.subr.mxu0 0.0
    %244 = vmatpush1.msra.mxu0 0.0
    %245 = vmatprep.subr.mxu0 0.0
    %246 = vmatpush1.msra.mxu0 0.0
    %247 = vmatprep.subr.mxu0 0.0
    %248 = vmatpush1.msra.mxu0 0.0
    %249 = vmatprep.subr.mxu0 0.0
    %250 = vmatpush1.msra.mxu0 0.0
    %251 = vmatprep.subr.mxu0 0.0
    %252 = vmatpush1.msra.mxu0 0.0
    %253 = vmatprep.subr.mxu0 0.0
    %254 = vmatpush1.msra.mxu0 0.0
    %255 = vmatprep.subr.mxu0 0.0
    %256 = vmatpush1.msra.mxu0 0.0
    %257 = vmatprep.subr.mxu0 0.0
    %258 = vmatpush1.msra.mxu0 0.0
    %259 = vmatprep.subr.mxu0 0.0
    %260 = vmatpush1.msra.mxu0 0.0
    %261 = vmatprep.subr.mxu0 0.0
    %262 = vmatpush1.msra.mxu0 0.0
    %263 = vmatprep.subr.mxu0 0.0
    %264 = vmatpush1.msra.mxu0 0.0
    %265 = vmatprep.subr.mxu0 0.0
    %266 = vmatpush1.msra.mxu0 0.0
    %267 = vmatprep.subr.mxu0 0.0
    %268 = vmatpush1.msra.mxu0 0.0
    %269 = vmatprep.subr.mxu0 0.0
    %270 = vmatpush1.msra.mxu0 0.0
    %271 = vmatprep.subr.mxu0 0.0
    %272 = vmatpush1.msra.mxu0 0.0
    %273 = vmatprep.mubr.f32.mxu0 0.0
    %274 = vmatmul.mubr.f32.gmra.mrb[0].mxu0 %v207
    %v275 = vpop.f32.mrb[0].mxu0
    %v276 = vadd.f32 %v203, %v275
    %v277 = vpop.f32.mrb[0].mxu0
    %278 = vdwg.mxu0
    %v279 = vadd.f32 %v276, %v50
    %v280 = vxor.u32 %v279, 2147483648
    %v281 = vmul.f32 %v280, 1.442695
    %v282 = vpow.pop %v281
    %v283 = vadd.f32 %v282, 1.0
    %v284 = vrcp.pop %v283
    %v285 = vmul.f32 1.0, %v284
    %287 = vrot.lane.b32.xlu0 %v279, 32
    %v288 = vpop.permute.xlu0 %287
    %v290 = vmul.f32 %v285, %v288
    %292 = vrot.lane.b32.xlu0 %v290, 64
    %v293 = vpop.permute.xlu0 %292
    %v295 = vadd.f32 %v279, %v293
    %v296 = vtanh.pop %v295
    %v297 = vsub.f32 1.0, %v285
    %299 = vrot.lane.b32.xlu0 %v296, 96
    %v300 = vpop.permute.xlu0 %299
    %v302 = vmul.f32 %v297, %v300
    %v303 = vlaneseq
    %v304 = vshrl.u32 %v303, 7
    %v305 = vsub.s32 0, %v304
    %v306 = vrot.slane %v55, %v305
    %307 = vrot.lane.b32.xlu0 %v306, 32
    %v308 = vpop.permute.xlu0 %307
    %v310 = vmul.f32 %v285, %v308
    %v311 = vadd.f32 %v302, %v310
    %v313 = vlaneseq
    %v314 = vshrl.u32 %v313, 7
    %v315 = vsub.s32 0, %v314
    %v316 = vrot.slane %v51, %v315
    %317 = vrot.lane.b32.xlu0 %v316, 32
    %v318 = vpop.permute.xlu0 %317
    %v320 = vmul.f32 %v311, %v318
    %322 = vrot.lane.b32.xlu0 %v320, 96
    %v323 = vpop.permute.xlu0 %322
    %vm325 = vcmask 253952
    %v326 = vsel %vm325, %v323, 0.0
    %327 = vadd.xlane.f32.xlu0 %v326
    %v328 = vpop.xlane.xlu0 %327
    %v329 = vadd.f32 %v328, %v52
    %vm330 = vcmp.eq.s32.totalorder %v54, 0
    %332 = vset.pattern.permute.xlu0 0
    %333 = vperm.xlu0 %332, %v329
    %v334 = vpop.permute.xlu0 %333
    %v336 = vsel %vm330, %v334, 0.0
    %s337 = scalar_lea.vmem %s0, 1
    %v338 = vld [vmem:[%s337] sm:$0x1]
    %v340 = vsel %vm57, %v338, 0
    %342 = vmatprep.subr.mxu0 0.0
    %343 = vmatpush1.msra.mxu0 %v35
    %344 = vmatprep.subr.mxu0 0.0
    %345 = vmatpush1.msra.mxu0 %v36
    %346 = vmatprep.subr.mxu0 0.0
    %347 = vmatpush1.msra.mxu0 %v37
    %348 = vmatprep.subr.mxu0 0.0
    %349 = vmatpush1.msra.mxu0 %v38
    %350 = vmatprep.subr.mxu0 0.0
    %351 = vmatpush1.msra.mxu0 %v39
    %352 = vmatprep.subr.mxu0 0.0
    %353 = vmatpush1.msra.mxu0 %v40
    %354 = vmatprep.subr.mxu0 0.0
    %355 = vmatpush1.msra.mxu0 0.0
    %356 = vmatprep.subr.mxu0 0.0
    %357 = vmatpush1.msra.mxu0 0.0
    %358 = vmatprep.subr.mxu0 0.0
    %359 = vmatpush1.msra.mxu0 0.0
    %360 = vmatprep.subr.mxu0 0.0
    %361 = vmatpush1.msra.mxu0 0.0
    %362 = vmatprep.subr.mxu0 0.0
    %363 = vmatpush1.msra.mxu0 0.0
    %364 = vmatprep.subr.mxu0 0.0
    %365 = vmatpush1.msra.mxu0 0.0
    %366 = vmatprep.subr.mxu0 0.0
    %367 = vmatpush1.msra.mxu0 0.0
    %368 = vmatprep.subr.mxu0 0.0
    %369 = vmatpush1.msra.mxu0 0.0
    %370 = vmatprep.subr.mxu0 0.0
    %371 = vmatpush1.msra.mxu0 0.0
    %372 = vmatprep.subr.mxu0 0.0
    %373 = vmatpush1.msra.mxu0 0.0
    %374 = vmatprep.subr.mxu0 0.0
    %375 = vmatpush1.msra.mxu0 0.0
    %376 = vmatprep.subr.mxu0 0.0
    %377 = vmatpush1.msra.mxu0 0.0
    %378 = vmatprep.subr.mxu0 0.0
    %379 = vmatpush1.msra.mxu0 0.0
    %380 = vmatprep.subr.mxu0 0.0
    %381 = vmatpush1.msra.mxu0 0.0
    %382 = vmatprep.subr.mxu0 0.0
    %383 = vmatpush1.msra.mxu0 0.0
    %384 = vmatprep.subr.mxu0 0.0
    %385 = vmatpush1.msra.mxu0 0.0
    %386 = vmatprep.subr.mxu0 0.0
    %387 = vmatpush1.msra.mxu0 0.0
    %388 = vmatprep.subr.mxu0 0.0
    %389 = vmatpush1.msra.mxu0 0.0
    %390 = vmatprep.subr.mxu0 0.0
    %391 = vmatpush1.msra.mxu0 0.0
    %392 = vmatprep.subr.mxu0 0.0
    %393 = vmatpush1.msra.mxu0 0.0
    %394 = vmatprep.subr.mxu0 0.0
    %395 = vmatpush1.msra.mxu0 0.0
    %396 = vmatprep.subr.mxu0 0.0
    %397 = vmatpush1.msra.mxu0 0.0
    %398 = vmatprep.subr.mxu0 0.0
    %399 = vmatpush1.msra.mxu0 0.0
    %400 = vmatprep.subr.mxu0 0.0
    %401 = vmatpush1.msra.mxu0 0.0
    %402 = vmatprep.subr.mxu0 0.0
    %403 = vmatpush1.msra.mxu0 0.0
    %404 = vmatprep.subr.mxu0 0.0
    %405 = vmatpush1.msra.mxu0 0.0
    %406 = vmatprep.mubr.f32.mxu0 0.0
    %407 = vmatmul.mubr.f32.gmra.mrb[0].mxu0 %v340
    %v408 = vpop.f32.mrb[0].mxu0
    %v409 = vadd.f32 %v41, %v408
    %v410 = vpop.f32.mrb[0].mxu0
    %411 = vdwg.mxu0
    %v412 = vmax.f32 %v409, 0.0
    %414 = vrot.lane.b32.xlu0 %v311, 96
    %v415 = vpop.permute.xlu0 %414
    %v416 = vsel %vm132, %v415, 0
    %418 = vmatprep.subr.mxu0 0.0
    %419 = vmatpush1.msra.mxu0 %v46
    %420 = vmatprep.subr.mxu0 0.0
    %421 = vmatpush1.msra.mxu0 %v47
    %422 = vmatprep.subr.mxu0 0.0
    %423 = vmatpush1.msra.mxu0 %v48
    %424 = vmatprep.subr.mxu0 0.0
    %425 = vmatpush1.msra.mxu0 %v49
    %426 = vmatprep.subr.mxu0 0.0
    %427 = vmatpush1.msra.mxu0 0.0
    %428 = vmatprep.subr.mxu0 0.0
    %429 = vmatpush1.msra.mxu0 0.0
    %430 = vmatprep.subr.mxu0 0.0
    %431 = vmatpush1.msra.mxu0 0.0
    %432 = vmatprep.subr.mxu0 0.0
    %433 = vmatpush1.msra.mxu0 0.0
    %434 = vmatprep.subr.mxu0 0.0
    %435 = vmatpush1.msra.mxu0 0.0
    %436 = vmatprep.subr.mxu0 0.0
    %437 = vmatpush1.msra.mxu0 0.0
    %438 = vmatprep.subr.mxu0 0.0
    %439 = vmatpush1.msra.mxu0 0.0
    %440 = vmatprep.subr.mxu0 0.0
    %441 = vmatpush1.msra.mxu0 0.0
    %442 = vmatprep.subr.mxu0 0.0
    %443 = vmatpush1.msra.mxu0 0.0
    %444 = vmatprep.subr.mxu0 0.0
    %445 = vmatpush1.msra.mxu0 0.0
    %446 = vmatprep.subr.mxu0 0.0
    %447 = vmatpush1.msra.mxu0 0.0
    %448 = vmatprep.subr.mxu0 0.0
    %449 = vmatpush1.msra.mxu0 0.0
    %450 = vmatprep.subr.mxu0 0.0
    %451 = vmatpush1.msra.mxu0 0.0
    %452 = vmatprep.subr.mxu0 0.0
    %453 = vmatpush1.msra.mxu0 0.0
    %454 = vmatprep.subr.mxu0 0.0
    %455 = vmatpush1.msra.mxu0 0.0
    %456 = vmatprep.subr.mxu0 0.0
    %457 = vmatpush1.msra.mxu0 0.0
    %458 = vmatprep.subr.mxu0 0.0
    %459 = vmatpush1.msra.mxu0 0.0
    %460 = vmatprep.subr.mxu0 0.0
    %461 = vmatpush1.msra.mxu0 0.0
    %462 = vmatprep.subr.mxu0 0.0
    %463 = vmatpush1.msra.mxu0 0.0
    %464 = vmatprep.subr.mxu0 0.0
    %465 = vmatpush1.msra.mxu0 0.0
    %466 = vmatprep.subr.mxu0 0.0
    %467 = vmatpush1.msra.mxu0 0.0
    %468 = vmatprep.subr.mxu0 0.0
    %469 = vmatpush1.msra.mxu0 0.0
    %470 = vmatprep.subr.mxu0 0.0
    %471 = vmatpush1.msra.mxu0 0.0
    %472 = vmatprep.subr.mxu0 0.0
    %473 = vmatpush1.msra.mxu0 0.0
    %474 = vmatprep.subr.mxu0 0.0
    %475 = vmatpush1.msra.mxu0 0.0
    %476 = vmatprep.subr.mxu0 0.0
    %477 = vmatpush1.msra.mxu0 0.0
    %478 = vmatprep.subr.mxu0 0.0
    %479 = vmatpush1.msra.mxu0 0.0
    %480 = vmatprep.subr.mxu0 0.0
    %481 = vmatpush1.msra.mxu0 0.0
    %482 = vmatprep.mubr.f32.mxu0 0.0
    %483 = vmatmul.mubr.f32.gmra.mrb[0].mxu0 %v416
    %v484 = vpop.f32.mrb[0].mxu0
    %v485 = vadd.f32 0.0, %v484
    %v486 = vpop.f32.mrb[0].mxu0
    %487 = vdwg.mxu0
    %v489 = vsel %vm132, %v412, 0
    %491 = vmatprep.subr.mxu0 0.0
    %492 = vmatpush1.msra.mxu0 %v42
    %493 = vmatprep.subr.mxu0 0.0
    %494 = vmatpush1.msra.mxu0 %v43
    %495 = vmatprep.subr.mxu0 0.0
    %496 = vmatpush1.msra.mxu0 %v44
    %497 = vmatprep.subr.mxu0 0.0
    %498 = vmatpush1.msra.mxu0 %v45
    %499 = vmatprep.subr.mxu0 0.0
    %500 = vmatpush1.msra.mxu0 0.0
    %501 = vmatprep.subr.mxu0 0.0
    %502 = vmatpush1.msra.mxu0 0.0
    %503 = vmatprep.subr.mxu0 0.0
    %504 = vmatpush1.msra.mxu0 0.0
    %505 = vmatprep.subr.mxu0 0.0
    %506 = vmatpush1.msra.mxu0 0.0
    %507 = vmatprep.subr.mxu0 0.0
    %508 = vmatpush1.msra.mxu0 0.0
    %509 = vmatprep.subr.mxu0 0.0
    %510 = vmatpush1.msra.mxu0 0.0
    %511 = vmatprep.subr.mxu0 0.0
    %512 = vmatpush1.msra.mxu0 0.0
    %513 = vmatprep.subr.mxu0 0.0
    %514 = vmatpush1.msra.mxu0 0.0
    %515 = vmatprep.subr.mxu0 0.0
    %516 = vmatpush1.msra.mxu0 0.0
    %517 = vmatprep.subr.mxu0 0.0
    %518 = vmatpush1.msra.mxu0 0.0
    %519 = vmatprep.subr.mxu0 0.0
    %520 = vmatpush1.msra.mxu0 0.0
    %521 = vmatprep.subr.mxu0 0.0
    %522 = vmatpush1.msra.mxu0 0.0
    %523 = vmatprep.subr.mxu0 0.0
    %524 = vmatpush1.msra.mxu0 0.0
    %525 = vmatprep.subr.mxu0 0.0
    %526 = vmatpush1.msra.mxu0 0.0
    %527 = vmatprep.subr.mxu0 0.0
    %528 = vmatpush1.msra.mxu0 0.0
    %529 = vmatprep.subr.mxu0 0.0
    %530 = vmatpush1.msra.mxu0 0.0
    %531 = vmatprep.subr.mxu0 0.0
    %532 = vmatpush1.msra.mxu0 0.0
    %533 = vmatprep.subr.mxu0 0.0
    %534 = vmatpush1.msra.mxu0 0.0
    %535 = vmatprep.subr.mxu0 0.0
    %536 = vmatpush1.msra.mxu0 0.0
    %537 = vmatprep.subr.mxu0 0.0
    %538 = vmatpush1.msra.mxu0 0.0
    %539 = vmatprep.subr.mxu0 0.0
    %540 = vmatpush1.msra.mxu0 0.0
    %541 = vmatprep.subr.mxu0 0.0
    %542 = vmatpush1.msra.mxu0 0.0
    %543 = vmatprep.subr.mxu0 0.0
    %544 = vmatpush1.msra.mxu0 0.0
    %545 = vmatprep.subr.mxu0 0.0
    %546 = vmatpush1.msra.mxu0 0.0
    %547 = vmatprep.subr.mxu0 0.0
    %548 = vmatpush1.msra.mxu0 0.0
    %549 = vmatprep.subr.mxu0 0.0
    %550 = vmatpush1.msra.mxu0 0.0
    %551 = vmatprep.subr.mxu0 0.0
    %552 = vmatpush1.msra.mxu0 0.0
    %553 = vmatprep.subr.mxu0 0.0
    %554 = vmatpush1.msra.mxu0 0.0
    %555 = vmatprep.mubr.f32.mxu0 0.0
    %556 = vmatmul.mubr.f32.gmra.mrb[0].mxu0 %v489
    %v557 = vpop.f32.mrb[0].mxu0
    %v558 = vadd.f32 %v485, %v557
    %v559 = vpop.f32.mrb[0].mxu0
    %560 = vdwg.mxu0
    %v561 = vadd.f32 %v558, %v50
    %v562 = vxor.u32 %v561, 2147483648
    %v563 = vmul.f32 %v562, 1.442695
    %v564 = vpow.pop %v563
    %v565 = vadd.f32 %v564, 1.0
    %v566 = vrcp.pop %v565
    %v567 = vmul.f32 1.0, %v566
    %569 = vrot.lane.b32.xlu0 %v561, 32
    %v570 = vpop.permute.xlu0 %569
    %v572 = vmul.f32 %v567, %v570
    %574 = vrot.lane.b32.xlu0 %v572, 64
    %v575 = vpop.permute.xlu0 %574
    %v577 = vadd.f32 %v561, %v575
    %v578 = vtanh.pop %v577
    %v579 = vsub.f32 1.0, %v567
    %581 = vrot.lane.b32.xlu0 %v578, 96
    %v582 = vpop.permute.xlu0 %581
    %v584 = vmul.f32 %v579, %v582
    %v585 = vmul.f32 %v567, %v311
    %v586 = vadd.f32 %v584, %v585
    %v587 = vmul.f32 %v586, %v318
    %589 = vrot.lane.b32.xlu0 %v587, 96
    %v590 = vpop.permute.xlu0 %589
    %v592 = vsel %vm325, %v590, 0.0
    %593 = vadd.xlane.f32.xlu0 %v592
    %v594 = vpop.xlane.xlu0 %593
    %v595 = vadd.f32 %v594, %v52
    %vm596 = vcmp.eq.s32.totalorder %v54, 1
    %598 = vset.pattern.permute.xlu0 0
    %599 = vperm.xlu0 %598, %v595
    %v600 = vpop.permute.xlu0 %599
    %v602 = vsel %vm596, %v600, %v336
    %s603 = scalar_lea.vmem %s0, 2
    %v604 = vld [vmem:[%s603] sm:$0x1]
    %v606 = vsel %vm57, %v604, 0
    %608 = vmatprep.subr.mxu0 0.0
    %609 = vmatpush1.msra.mxu0 %v35
    %610 = vmatprep.subr.mxu0 0.0
    %611 = vmatpush1.msra.mxu0 %v36
    %612 = vmatprep.subr.mxu0 0.0
    %613 = vmatpush1.msra.mxu0 %v37
    %614 = vmatprep.subr.mxu0 0.0
    %615 = vmatpush1.msra.mxu0 %v38
    %616 = vmatprep.subr.mxu0 0.0
    %617 = vmatpush1.msra.mxu0 %v39
    %618 = vmatprep.subr.mxu0 0.0
    %619 = vmatpush1.msra.mxu0 %v40
    %620 = vmatprep.subr.mxu0 0.0
    %621 = vmatpush1.msra.mxu0 0.0
    %622 = vmatprep.subr.mxu0 0.0
    %623 = vmatpush1.msra.mxu0 0.0
    %624 = vmatprep.subr.mxu0 0.0
    %625 = vmatpush1.msra.mxu0 0.0
    %626 = vmatprep.subr.mxu0 0.0
    %627 = vmatpush1.msra.mxu0 0.0
    %628 = vmatprep.subr.mxu0 0.0
    %629 = vmatpush1.msra.mxu0 0.0
    %630 = vmatprep.subr.mxu0 0.0
    %631 = vmatpush1.msra.mxu0 0.0
    %632 = vmatprep.subr.mxu0 0.0
    %633 = vmatpush1.msra.mxu0 0.0
    %634 = vmatprep.subr.mxu0 0.0
    %635 = vmatpush1.msra.mxu0 0.0
    %636 = vmatprep.subr.mxu0 0.0
    %637 = vmatpush1.msra.mxu0 0.0
    %638 = vmatprep.subr.mxu0 0.0
    %639 = vmatpush1.msra.mxu0 0.0
    %640 = vmatprep.subr.mxu0 0.0
    %641 = vmatpush1.msra.mxu0 0.0
    %642 = vmatprep.subr.mxu0 0.0
    %643 = vmatpush1.msra.mxu0 0.0
    %644 = vmatprep.subr.mxu0 0.0
    %645 = vmatpush1.msra.mxu0 0.0
    %646 = vmatprep.subr.mxu0 0.0
    %647 = vmatpush1.msra.mxu0 0.0
    %648 = vmatprep.subr.mxu0 0.0
    %649 = vmatpush1.msra.mxu0 0.0
    %650 = vmatprep.subr.mxu0 0.0
    %651 = vmatpush1.msra.mxu0 0.0
    %652 = vmatprep.subr.mxu0 0.0
    %653 = vmatpush1.msra.mxu0 0.0
    %654 = vmatprep.subr.mxu0 0.0
    %655 = vmatpush1.msra.mxu0 0.0
    %656 = vmatprep.subr.mxu0 0.0
    %657 = vmatpush1.msra.mxu0 0.0
    %658 = vmatprep.subr.mxu0 0.0
    %659 = vmatpush1.msra.mxu0 0.0
    %660 = vmatprep.subr.mxu0 0.0
    %661 = vmatpush1.msra.mxu0 0.0
    %662 = vmatprep.subr.mxu0 0.0
    %663 = vmatpush1.msra.mxu0 0.0
    %664 = vmatprep.subr.mxu0 0.0
    %665 = vmatpush1.msra.mxu0 0.0
    %666 = vmatprep.subr.mxu0 0.0
    %667 = vmatpush1.msra.mxu0 0.0
    %668 = vmatprep.subr.mxu0 0.0
    %669 = vmatpush1.msra.mxu0 0.0
    %670 = vmatprep.subr.mxu0 0.0
    %671 = vmatpush1.msra.mxu0 0.0
    %672 = vmatprep.mubr.f32.mxu0 0.0
    %673 = vmatmul.mubr.f32.gmra.mrb[0].mxu0 %v606
    %v674 = vpop.f32.mrb[0].mxu0
    %v675 = vadd.f32 %v41, %v674
    %v676 = vpop.f32.mrb[0].mxu0
    %677 = vdwg.mxu0
    %v678 = vmax.f32 %v675, 0.0
    %680 = vrot.lane.b32.xlu0 %v586, 96
    %v681 = vpop.permute.xlu0 %680
    %v682 = vsel %vm132, %v681, 0
    %684 = vmatprep.subr.mxu0 0.0
    %685 = vmatpush1.msra.mxu0 %v46
    %686 = vmatprep.subr.mxu0 0.0
    %687 = vmatpush1.msra.mxu0 %v47
    %688 = vmatprep.subr.mxu0 0.0
    %689 = vmatpush1.msra.mxu0 %v48
    %690 = vmatprep.subr.mxu0 0.0
    %691 = vmatpush1.msra.mxu0 %v49
    %692 = vmatprep.subr.mxu0 0.0
    %693 = vmatpush1.msra.mxu0 0.0
    %694 = vmatprep.subr.mxu0 0.0
    %695 = vmatpush1.msra.mxu0 0.0
    %696 = vmatprep.subr.mxu0 0.0
    %697 = vmatpush1.msra.mxu0 0.0
    %698 = vmatprep.subr.mxu0 0.0
    %699 = vmatpush1.msra.mxu0 0.0
    %700 = vmatprep.subr.mxu0 0.0
    %701 = vmatpush1.msra.mxu0 0.0
    %702 = vmatprep.subr.mxu0 0.0
    %703 = vmatpush1.msra.mxu0 0.0
    %704 = vmatprep.subr.mxu0 0.0
    %705 = vmatpush1.msra.mxu0 0.0
    %706 = vmatprep.subr.mxu0 0.0
    %707 = vmatpush1.msra.mxu0 0.0
    %708 = vmatprep.subr.mxu0 0.0
    %709 = vmatpush1.msra.mxu0 0.0
    %710 = vmatprep.subr.mxu0 0.0
    %711 = vmatpush1.msra.mxu0 0.0
    %712 = vmatprep.subr.mxu0 0.0
    %713 = vmatpush1.msra.mxu0 0.0
    %714 = vmatprep.subr.mxu0 0.0
    %715 = vmatpush1.msra.mxu0 0.0
    %716 = vmatprep.subr.mxu0 0.0
    %717 = vmatpush1.msra.mxu0 0.0
    %718 = vmatprep.subr.mxu0 0.0
    %719 = vmatpush1.msra.mxu0 0.0
    %720 = vmatprep.subr.mxu0 0.0
    %721 = vmatpush1.msra.mxu0 0.0
    %722 = vmatprep.subr.mxu0 0.0
    %723 = vmatpush1.msra.mxu0 0.0
    %724 = vmatprep.subr.mxu0 0.0
    %725 = vmatpush1.msra.mxu0 0.0
    %726 = vmatprep.subr.mxu0 0.0
    %727 = vmatpush1.msra.mxu0 0.0
    %728 = vmatprep.subr.mxu0 0.0
    %729 = vmatpush1.msra.mxu0 0.0
    %730 = vmatprep.subr.mxu0 0.0
    %731 = vmatpush1.msra.mxu0 0.0
    %732 = vmatprep.subr.mxu0 0.0
    %733 = vmatpush1.msra.mxu0 0.0
    %734 = vmatprep.subr.mxu0 0.0
    %735 = vmatpush1.msra.mxu0 0.0
    %736 = vmatprep.subr.mxu0 0.0
    %737 = vmatpush1.msra.mxu0 0.0
    %738 = vmatprep.subr.mxu0 0.0
    %739 = vmatpush1.msra.mxu0 0.0
    %740 = vmatprep.subr.mxu0 0.0
    %741 = vmatpush1.msra.mxu0 0.0
    %742 = vmatprep.subr.mxu0 0.0
    %743 = vmatpush1.msra.mxu0 0.0
    %744 = vmatprep.subr.mxu0 0.0
    %745 = vmatpush1.msra.mxu0 0.0
    %746 = vmatprep.subr.mxu0 0.0
    %747 = vmatpush1.msra.mxu0 0.0
    %748 = vmatprep.mubr.f32.mxu0 0.0
    %749 = vmatmul.mubr.f32.gmra.mrb[0].mxu0 %v682
    %v750 = vpop.f32.mrb[0].mxu0
    %v751 = vadd.f32 0.0, %v750
    %v752 = vpop.f32.mrb[0].mxu0
    %753 = vdwg.mxu0
    %v755 = vsel %vm132, %v678, 0
    %757 = vmatprep.subr.mxu0 0.0
    %758 = vmatpush1.msra.mxu0 %v42
    %759 = vmatprep.subr.mxu0 0.0
    %760 = vmatpush1.msra.mxu0 %v43
    %761 = vmatprep.subr.mxu0 0.0
    %762 = vmatpush1.msra.mxu0 %v44
    %763 = vmatprep.subr.mxu0 0.0
    %764 = vmatpush1.msra.mxu0 %v45
    %765 = vmatprep.subr.mxu0 0.0
    %766 = vmatpush1.msra.mxu0 0.0
    %767 = vmatprep.subr.mxu0 0.0
    %768 = vmatpush1.msra.mxu0 0.0
    %769 = vmatprep.subr.mxu0 0.0
    %770 = vmatpush1.msra.mxu0 0.0
    %771 = vmatprep.subr.mxu0 0.0
    %772 = vmatpush1.msra.mxu0 0.0
    %773 = vmatprep.subr.mxu0 0.0
    %774 = vmatpush1.msra.mxu0 0.0
    %775 = vmatprep.subr.mxu0 0.0
    %776 = vmatpush1.msra.mxu0 0.0
    %777 = vmatprep.subr.mxu0 0.0
    %778 = vmatpush1.msra.mxu0 0.0
    %779 = vmatprep.subr.mxu0 0.0
    %780 = vmatpush1.msra.mxu0 0.0
    %781 = vmatprep.subr.mxu0 0.0
    %782 = vmatpush1.msra.mxu0 0.0
    %783 = vmatprep.subr.mxu0 0.0
    %784 = vmatpush1.msra.mxu0 0.0
    %785 = vmatprep.subr.mxu0 0.0
    %786 = vmatpush1.msra.mxu0 0.0
    %787 = vmatprep.subr.mxu0 0.0
    %788 = vmatpush1.msra.mxu0 0.0
    %789 = vmatprep.subr.mxu0 0.0
    %790 = vmatpush1.msra.mxu0 0.0
    %791 = vmatprep.subr.mxu0 0.0
    %792 = vmatpush1.msra.mxu0 0.0
    %793 = vmatprep.subr.mxu0 0.0
    %794 = vmatpush1.msra.mxu0 0.0
    %795 = vmatprep.subr.mxu0 0.0
    %796 = vmatpush1.msra.mxu0 0.0
    %797 = vmatprep.subr.mxu0 0.0
    %798 = vmatpush1.msra.mxu0 0.0
    %799 = vmatprep.subr.mxu0 0.0
    %800 = vmatpush1.msra.mxu0 0.0
    %801 = vmatprep.subr.mxu0 0.0
    %802 = vmatpush1.msra.mxu0 0.0
    %803 = vmatprep.subr.mxu0 0.0
    %804 = vmatpush1.msra.mxu0 0.0
    %805 = vmatprep.subr.mxu0 0.0
    %806 = vmatpush1.msra.mxu0 0.0
    %807 = vmatprep.subr.mxu0 0.0
    %808 = vmatpush1.msra.mxu0 0.0
    %809 = vmatprep.subr.mxu0 0.0
    %810 = vmatpush1.msra.mxu0 0.0
    %811 = vmatprep.subr.mxu0 0.0
    %812 = vmatpush1.msra.mxu0 0.0
    %813 = vmatprep.subr.mxu0 0.0
    %814 = vmatpush1.msra.mxu0 0.0
    %815 = vmatprep.subr.mxu0 0.0
    %816 = vmatpush1.msra.mxu0 0.0
    %817 = vmatprep.subr.mxu0 0.0
    %818 = vmatpush1.msra.mxu0 0.0
    %819 = vmatprep.subr.mxu0 0.0
    %820 = vmatpush1.msra.mxu0 0.0
    %821 = vmatprep.mubr.f32.mxu0 0.0
    %822 = vmatmul.mubr.f32.gmra.mrb[0].mxu0 %v755
    %v823 = vpop.f32.mrb[0].mxu0
    %v824 = vadd.f32 %v751, %v823
    %v825 = vpop.f32.mrb[0].mxu0
    %826 = vdwg.mxu0
    %v827 = vadd.f32 %v824, %v50
    %v828 = vxor.u32 %v827, 2147483648
    %v829 = vmul.f32 %v828, 1.442695
    %v830 = vpow.pop %v829
    %v831 = vadd.f32 %v830, 1.0
    %v832 = vrcp.pop %v831
    %v833 = vmul.f32 1.0, %v832
    %835 = vrot.lane.b32.xlu0 %v827, 32
    %v836 = vpop.permute.xlu0 %835
    %v838 = vmul.f32 %v833, %v836
    %840 = vrot.lane.b32.xlu0 %v838, 64
    %v841 = vpop.permute.xlu0 %840
    %v843 = vadd.f32 %v827, %v841
    %v844 = vtanh.pop %v843
    %v845 = vsub.f32 1.0, %v833
    %847 = vrot.lane.b32.xlu0 %v844, 96
    %v848 = vpop.permute.xlu0 %847
    %v850 = vmul.f32 %v845, %v848
    %v851 = vmul.f32 %v833, %v586
    %v852 = vadd.f32 %v850, %v851
    %v853 = vmul.f32 %v852, %v318
    %855 = vrot.lane.b32.xlu0 %v853, 96
    %v856 = vpop.permute.xlu0 %855
    %v858 = vsel %vm325, %v856, 0.0
    %859 = vadd.xlane.f32.xlu0 %v858
    %v860 = vpop.xlane.xlu0 %859
    %v861 = vadd.f32 %v860, %v52
    %vm862 = vcmp.eq.s32.totalorder %v54, 2
    %864 = vset.pattern.permute.xlu0 0
    %865 = vperm.xlu0 %864, %v861
    %v866 = vpop.permute.xlu0 %865
    %v868 = vsel %vm862, %v866, %v602
    %s869 = scalar_lea.vmem %s0, 3
    %v870 = vld [vmem:[%s869] sm:$0x1]
    %v872 = vsel %vm57, %v870, 0
    %874 = vmatprep.subr.mxu0 0.0
    %875 = vmatpush1.msra.mxu0 %v35
    %876 = vmatprep.subr.mxu0 0.0
    %877 = vmatpush1.msra.mxu0 %v36
    %878 = vmatprep.subr.mxu0 0.0
    %879 = vmatpush1.msra.mxu0 %v37
    %880 = vmatprep.subr.mxu0 0.0
    %881 = vmatpush1.msra.mxu0 %v38
    %882 = vmatprep.subr.mxu0 0.0
    %883 = vmatpush1.msra.mxu0 %v39
    %884 = vmatprep.subr.mxu0 0.0
    %885 = vmatpush1.msra.mxu0 %v40
    %886 = vmatprep.subr.mxu0 0.0
    %887 = vmatpush1.msra.mxu0 0.0
    %888 = vmatprep.subr.mxu0 0.0
    %889 = vmatpush1.msra.mxu0 0.0
    %890 = vmatprep.subr.mxu0 0.0
    %891 = vmatpush1.msra.mxu0 0.0
    %892 = vmatprep.subr.mxu0 0.0
    %893 = vmatpush1.msra.mxu0 0.0
    %894 = vmatprep.subr.mxu0 0.0
    %895 = vmatpush1.msra.mxu0 0.0
    %896 = vmatprep.subr.mxu0 0.0
    %897 = vmatpush1.msra.mxu0 0.0
    %898 = vmatprep.subr.mxu0 0.0
    %899 = vmatpush1.msra.mxu0 0.0
    %900 = vmatprep.subr.mxu0 0.0
    %901 = vmatpush1.msra.mxu0 0.0
    %902 = vmatprep.subr.mxu0 0.0
    %903 = vmatpush1.msra.mxu0 0.0
    %904 = vmatprep.subr.mxu0 0.0
    %905 = vmatpush1.msra.mxu0 0.0
    %906 = vmatprep.subr.mxu0 0.0
    %907 = vmatpush1.msra.mxu0 0.0
    %908 = vmatprep.subr.mxu0 0.0
    %909 = vmatpush1.msra.mxu0 0.0
    %910 = vmatprep.subr.mxu0 0.0
    %911 = vmatpush1.msra.mxu0 0.0
    %912 = vmatprep.subr.mxu0 0.0
    %913 = vmatpush1.msra.mxu0 0.0
    %914 = vmatprep.subr.mxu0 0.0
    %915 = vmatpush1.msra.mxu0 0.0
    %916 = vmatprep.subr.mxu0 0.0
    %917 = vmatpush1.msra.mxu0 0.0
    %918 = vmatprep.subr.mxu0 0.0
    %919 = vmatpush1.msra.mxu0 0.0
    %920 = vmatprep.subr.mxu0 0.0
    %921 = vmatpush1.msra.mxu0 0.0
    %922 = vmatprep.subr.mxu0 0.0
    %923 = vmatpush1.msra.mxu0 0.0
    %924 = vmatprep.subr.mxu0 0.0
    %925 = vmatpush1.msra.mxu0 0.0
    %926 = vmatprep.subr.mxu0 0.0
    %927 = vmatpush1.msra.mxu0 0.0
    %928 = vmatprep.subr.mxu0 0.0
    %929 = vmatpush1.msra.mxu0 0.0
    %930 = vmatprep.subr.mxu0 0.0
    %931 = vmatpush1.msra.mxu0 0.0
    %932 = vmatprep.subr.mxu0 0.0
    %933 = vmatpush1.msra.mxu0 0.0
    %934 = vmatprep.subr.mxu0 0.0
    %935 = vmatpush1.msra.mxu0 0.0
    %936 = vmatprep.subr.mxu0 0.0
    %937 = vmatpush1.msra.mxu0 0.0
    %938 = vmatprep.mubr.f32.mxu0 0.0
    %939 = vmatmul.mubr.f32.gmra.mrb[0].mxu0 %v872
    %v940 = vpop.f32.mrb[0].mxu0
    %v941 = vadd.f32 %v41, %v940
    %v942 = vpop.f32.mrb[0].mxu0
    %943 = vdwg.mxu0
    %v944 = vmax.f32 %v941, 0.0
    %946 = vrot.lane.b32.xlu0 %v852, 96
    %v947 = vpop.permute.xlu0 %946
    %v948 = vsel %vm132, %v947, 0
    %950 = vmatprep.subr.mxu0 0.0
    %951 = vmatpush1.msra.mxu0 %v46
    %952 = vmatprep.subr.mxu0 0.0
    %953 = vmatpush1.msra.mxu0 %v47
    %954 = vmatprep.subr.mxu0 0.0
    %955 = vmatpush1.msra.mxu0 %v48
    %956 = vmatprep.subr.mxu0 0.0
    %957 = vmatpush1.msra.mxu0 %v49
    %958 = vmatprep.subr.mxu0 0.0
    %959 = vmatpush1.msra.mxu0 0.0
    %960 = vmatprep.subr.mxu0 0.0
    %961 = vmatpush1.msra.mxu0 0.0
    %962 = vmatprep.subr.mxu0 0.0
    %963 = vmatpush1.msra.mxu0 0.0
    %964 = vmatprep.subr.mxu0 0.0
    %965 = vmatpush1.msra.mxu0 0.0
    %966 = vmatprep.subr.mxu0 0.0
    %967 = vmatpush1.msra.mxu0 0.0
    %968 = vmatprep.subr.mxu0 0.0
    %969 = vmatpush1.msra.mxu0 0.0
    %970 = vmatprep.subr.mxu0 0.0
    %971 = vmatpush1.msra.mxu0 0.0
    %972 = vmatprep.subr.mxu0 0.0
    %973 = vmatpush1.msra.mxu0 0.0
    %974 = vmatprep.subr.mxu0 0.0
    %975 = vmatpush1.msra.mxu0 0.0
    %976 = vmatprep.subr.mxu0 0.0
    %977 = vmatpush1.msra.mxu0 0.0
    %978 = vmatprep.subr.mxu0 0.0
    %979 = vmatpush1.msra.mxu0 0.0
    %980 = vmatprep.subr.mxu0 0.0
    %981 = vmatpush1.msra.mxu0 0.0
    %982 = vmatprep.subr.mxu0 0.0
    %983 = vmatpush1.msra.mxu0 0.0
    %984 = vmatprep.subr.mxu0 0.0
    %985 = vmatpush1.msra.mxu0 0.0
    %986 = vmatprep.subr.mxu0 0.0
    %987 = vmatpush1.msra.mxu0 0.0
    %988 = vmatprep.subr.mxu0 0.0
    %989 = vmatpush1.msra.mxu0 0.0
    %990 = vmatprep.subr.mxu0 0.0
    %991 = vmatpush1.msra.mxu0 0.0
    %992 = vmatprep.subr.mxu0 0.0
    %993 = vmatpush1.msra.mxu0 0.0
    %994 = vmatprep.subr.mxu0 0.0
    %995 = vmatpush1.msra.mxu0 0.0
    %996 = vmatprep.subr.mxu0 0.0
    %997 = vmatpush1.msra.mxu0 0.0
    %998 = vmatprep.subr.mxu0 0.0
    %999 = vmatpush1.msra.mxu0 0.0
    %1000 = vmatprep.subr.mxu0 0.0
    %1001 = vmatpush1.msra.mxu0 0.0
    %1002 = vmatprep.subr.mxu0 0.0
    %1003 = vmatpush1.msra.mxu0 0.0
    %1004 = vmatprep.subr.mxu0 0.0
    %1005 = vmatpush1.msra.mxu0 0.0
    %1006 = vmatprep.subr.mxu0 0.0
    %1007 = vmatpush1.msra.mxu0 0.0
    %1008 = vmatprep.subr.mxu0 0.0
    %1009 = vmatpush1.msra.mxu0 0.0
    %1010 = vmatprep.subr.mxu0 0.0
    %1011 = vmatpush1.msra.mxu0 0.0
    %1012 = vmatprep.subr.mxu0 0.0
    %1013 = vmatpush1.msra.mxu0 0.0
    %1014 = vmatprep.mubr.f32.mxu0 0.0
    %1015 = vmatmul.mubr.f32.gmra.mrb[0].mxu0 %v948
    %v1016 = vpop.f32.mrb[0].mxu0
    %v1017 = vadd.f32 0.0, %v1016
    %v1018 = vpop.f32.mrb[0].mxu0
    %1019 = vdwg.mxu0
    %v1021 = vsel %vm132, %v944, 0
    %1023 = vmatprep.subr.mxu0 0.0
    %1024 = vmatpush1.msra.mxu0 %v42
    %1025 = vmatprep.subr.mxu0 0.0
    %1026 = vmatpush1.msra.mxu0 %v43
    %1027 = vmatprep.subr.mxu0 0.0
    %1028 = vmatpush1.msra.mxu0 %v44
    %1029 = vmatprep.subr.mxu0 0.0
    %1030 = vmatpush1.msra.mxu0 %v45
    %1031 = vmatprep.subr.mxu0 0.0
    %1032 = vmatpush1.msra.mxu0 0.0
    %1033 = vmatprep.subr.mxu0 0.0
    %1034 = vmatpush1.msra.mxu0 0.0
    %1035 = vmatprep.subr.mxu0 0.0
    %1036 = vmatpush1.msra.mxu0 0.0
    %1037 = vmatprep.subr.mxu0 0.0
    %1038 = vmatpush1.msra.mxu0 0.0
    %1039 = vmatprep.subr.mxu0 0.0
    %1040 = vmatpush1.msra.mxu0 0.0
    %1041 = vmatprep.subr.mxu0 0.0
    %1042 = vmatpush1.msra.mxu0 0.0
    %1043 = vmatprep.subr.mxu0 0.0
    %1044 = vmatpush1.msra.mxu0 0.0
    %1045 = vmatprep.subr.mxu0 0.0
    %1046 = vmatpush1.msra.mxu0 0.0
    %1047 = vmatprep.subr.mxu0 0.0
    %1048 = vmatpush1.msra.mxu0 0.0
    %1049 = vmatprep.subr.mxu0 0.0
    %1050 = vmatpush1.msra.mxu0 0.0
    %1051 = vmatprep.subr.mxu0 0.0
    %1052 = vmatpush1.msra.mxu0 0.0
    %1053 = vmatprep.subr.mxu0 0.0
    %1054 = vmatpush1.msra.mxu0 0.0
    %1055 = vmatprep.subr.mxu0 0.0
    %1056 = vmatpush1.msra.mxu0 0.0
    %1057 = vmatprep.subr.mxu0 0.0
    %1058 = vmatpush1.msra.mxu0 0.0
    %1059 = vmatprep.subr.mxu0 0.0
    %1060 = vmatpush1.msra.mxu0 0.0
    %1061 = vmatprep.subr.mxu0 0.0
    %1062 = vmatpush1.msra.mxu0 0.0
    %1063 = vmatprep.subr.mxu0 0.0
    %1064 = vmatpush1.msra.mxu0 0.0
    %1065 = vmatprep.subr.mxu0 0.0
    %1066 = vmatpush1.msra.mxu0 0.0
    %1067 = vmatprep.subr.mxu0 0.0
    %1068 = vmatpush1.msra.mxu0 0.0
    %1069 = vmatprep.subr.mxu0 0.0
    %1070 = vmatpush1.msra.mxu0 0.0
    %1071 = vmatprep.subr.mxu0 0.0
    %1072 = vmatpush1.msra.mxu0 0.0
    %1073 = vmatprep.subr.mxu0 0.0
    %1074 = vmatpush1.msra.mxu0 0.0
    %1075 = vmatprep.subr.mxu0 0.0
    %1076 = vmatpush1.msra.mxu0 0.0
    %1077 = vmatprep.subr.mxu0 0.0
    %1078 = vmatpush1.msra.mxu0 0.0
    %1079 = vmatprep.subr.mxu0 0.0
    %1080 = vmatpush1.msra.mxu0 0.0
    %1081 = vmatprep.subr.mxu0 0.0
    %1082 = vmatpush1.msra.mxu0 0.0
    %1083 = vmatprep.subr.mxu0 0.0
    %1084 = vmatpush1.msra.mxu0 0.0
    %1085 = vmatprep.subr.mxu0 0.0
    %1086 = vmatpush1.msra.mxu0 0.0
    %1087 = vmatprep.mubr.f32.mxu0 0.0
    %1088 = vmatmul.mubr.f32.gmra.mrb[0].mxu0 %v1021
    %v1089 = vpop.f32.mrb[0].mxu0
    %v1090 = vadd.f32 %v1017, %v1089
    %v1091 = vpop.f32.mrb[0].mxu0
    %1092 = vdwg.mxu0
    %v1093 = vadd.f32 %v1090, %v50
    %v1094 = vxor.u32 %v1093, 2147483648
    %v1095 = vmul.f32 %v1094, 1.442695
    %v1096 = vpow.pop %v1095
    %v1097 = vadd.f32 %v1096, 1.0
    %v1098 = vrcp.pop %v1097
    %v1099 = vmul.f32 1.0, %v1098
    %1101 = vrot.lane.b32.xlu0 %v1093, 32
    %v1102 = vpop.permute.xlu0 %1101
    %v1104 = vmul.f32 %v1099, %v1102
    %1106 = vrot.lane.b32.xlu0 %v1104, 64
    %v1107 = vpop.permute.xlu0 %1106
    %v1109 = vadd.f32 %v1093, %v1107
    %v1110 = vtanh.pop %v1109
    %v1111 = vsub.f32 1.0, %v1099
    %1113 = vrot.lane.b32.xlu0 %v1110, 96
    %v1114 = vpop.permute.xlu0 %1113
    %v1116 = vmul.f32 %v1111, %v1114
    %v1117 = vmul.f32 %v1099, %v852
    %v1118 = vadd.f32 %v1116, %v1117
    %v1119 = vmul.f32 %v1118, %v318
    %1121 = vrot.lane.b32.xlu0 %v1119, 96
    %v1122 = vpop.permute.xlu0 %1121
    %v1124 = vsel %vm325, %v1122, 0.0
    %1125 = vadd.xlane.f32.xlu0 %v1124
    %v1126 = vpop.xlane.xlu0 %1125
    %v1127 = vadd.f32 %v1126, %v52
    %vm1128 = vcmp.eq.s32.totalorder %v54, 3
    %1130 = vset.pattern.permute.xlu0 0
    %1131 = vperm.xlu0 %1130, %v1127
    %v1132 = vpop.permute.xlu0 %1131
    %v1134 = vsel %vm1128, %v1132, %v868
    %s1135 = scalar_lea.vmem %s0, 4
    %v1136 = vld [vmem:[%s1135] sm:$0x1]
    %v1138 = vsel %vm57, %v1136, 0
    %1140 = vmatprep.subr.mxu0 0.0
    %1141 = vmatpush1.msra.mxu0 %v35
    %1142 = vmatprep.subr.mxu0 0.0
    %1143 = vmatpush1.msra.mxu0 %v36
    %1144 = vmatprep.subr.mxu0 0.0
    %1145 = vmatpush1.msra.mxu0 %v37
    %1146 = vmatprep.subr.mxu0 0.0
    %1147 = vmatpush1.msra.mxu0 %v38
    %1148 = vmatprep.subr.mxu0 0.0
    %1149 = vmatpush1.msra.mxu0 %v39
    %1150 = vmatprep.subr.mxu0 0.0
    %1151 = vmatpush1.msra.mxu0 %v40
    %1152 = vmatprep.subr.mxu0 0.0
    %1153 = vmatpush1.msra.mxu0 0.0
    %1154 = vmatprep.subr.mxu0 0.0
    %1155 = vmatpush1.msra.mxu0 0.0
    %1156 = vmatprep.subr.mxu0 0.0
    %1157 = vmatpush1.msra.mxu0 0.0
    %1158 = vmatprep.subr.mxu0 0.0
    %1159 = vmatpush1.msra.mxu0 0.0
    %1160 = vmatprep.subr.mxu0 0.0
    %1161 = vmatpush1.msra.mxu0 0.0
    %1162 = vmatprep.subr.mxu0 0.0
    %1163 = vmatpush1.msra.mxu0 0.0
    %1164 = vmatprep.subr.mxu0 0.0
    %1165 = vmatpush1.msra.mxu0 0.0
    %1166 = vmatprep.subr.mxu0 0.0
    %1167 = vmatpush1.msra.mxu0 0.0
    %1168 = vmatprep.subr.mxu0 0.0
    %1169 = vmatpush1.msra.mxu0 0.0
    %1170 = vmatprep.subr.mxu0 0.0
    %1171 = vmatpush1.msra.mxu0 0.0
    %1172 = vmatprep.subr.mxu0 0.0
    %1173 = vmatpush1.msra.mxu0 0.0
    %1174 = vmatprep.subr.mxu0 0.0
    %1175 = vmatpush1.msra.mxu0 0.0
    %1176 = vmatprep.subr.mxu0 0.0
    %1177 = vmatpush1.msra.mxu0 0.0
    %1178 = vmatprep.subr.mxu0 0.0
    %1179 = vmatpush1.msra.mxu0 0.0
    %1180 = vmatprep.subr.mxu0 0.0
    %1181 = vmatpush1.msra.mxu0 0.0
    %1182 = vmatprep.subr.mxu0 0.0
    %1183 = vmatpush1.msra.mxu0 0.0
    %1184 = vmatprep.subr.mxu0 0.0
    %1185 = vmatpush1.msra.mxu0 0.0
    %1186 = vmatprep.subr.mxu0 0.0
    %1187 = vmatpush1.msra.mxu0 0.0
    %1188 = vmatprep.subr.mxu0 0.0
    %1189 = vmatpush1.msra.mxu0 0.0
    %1190 = vmatprep.subr.mxu0 0.0
    %1191 = vmatpush1.msra.mxu0 0.0
    %1192 = vmatprep.subr.mxu0 0.0
    %1193 = vmatpush1.msra.mxu0 0.0
    %1194 = vmatprep.subr.mxu0 0.0
    %1195 = vmatpush1.msra.mxu0 0.0
    %1196 = vmatprep.subr.mxu0 0.0
    %1197 = vmatpush1.msra.mxu0 0.0
    %1198 = vmatprep.subr.mxu0 0.0
    %1199 = vmatpush1.msra.mxu0 0.0
    %1200 = vmatprep.subr.mxu0 0.0
    %1201 = vmatpush1.msra.mxu0 0.0
    %1202 = vmatprep.subr.mxu0 0.0
    %1203 = vmatpush1.msra.mxu0 0.0
    %1204 = vmatprep.mubr.f32.mxu0 0.0
    %1205 = vmatmul.mubr.f32.gmra.mrb[0].mxu0 %v1138
    %v1206 = vpop.f32.mrb[0].mxu0
    %v1207 = vadd.f32 %v41, %v1206
    %v1208 = vpop.f32.mrb[0].mxu0
    %1209 = vdwg.mxu0
    %v1210 = vmax.f32 %v1207, 0.0
    %1212 = vrot.lane.b32.xlu0 %v1118, 96
    %v1213 = vpop.permute.xlu0 %1212
    %v1214 = vsel %vm132, %v1213, 0
    %1216 = vmatprep.subr.mxu0 0.0
    %1217 = vmatpush1.msra.mxu0 %v46
    %1218 = vmatprep.subr.mxu0 0.0
    %1219 = vmatpush1.msra.mxu0 %v47
    %1220 = vmatprep.subr.mxu0 0.0
    %1221 = vmatpush1.msra.mxu0 %v48
    %1222 = vmatprep.subr.mxu0 0.0
    %1223 = vmatpush1.msra.mxu0 %v49
    %1224 = vmatprep.subr.mxu0 0.0
    %1225 = vmatpush1.msra.mxu0 0.0
    %1226 = vmatprep.subr.mxu0 0.0
    %1227 = vmatpush1.msra.mxu0 0.0
    %1228 = vmatprep.subr.mxu0 0.0
    %1229 = vmatpush1.msra.mxu0 0.0
    %1230 = vmatprep.subr.mxu0 0.0
    %1231 = vmatpush1.msra.mxu0 0.0
    %1232 = vmatprep.subr.mxu0 0.0
    %1233 = vmatpush1.msra.mxu0 0.0
    %1234 = vmatprep.subr.mxu0 0.0
    %1235 = vmatpush1.msra.mxu0 0.0
    %1236 = vmatprep.subr.mxu0 0.0
    %1237 = vmatpush1.msra.mxu0 0.0
    %1238 = vmatprep.subr.mxu0 0.0
    %1239 = vmatpush1.msra.mxu0 0.0
    %1240 = vmatprep.subr.mxu0 0.0
    %1241 = vmatpush1.msra.mxu0 0.0
    %1242 = vmatprep.subr.mxu0 0.0
    %1243 = vmatpush1.msra.mxu0 0.0
    %1244 = vmatprep.subr.mxu0 0.0
    %1245 = vmatpush1.msra.mxu0 0.0
    %1246 = vmatprep.subr.mxu0 0.0
    %1247 = vmatpush1.msra.mxu0 0.0
    %1248 = vmatprep.subr.mxu0 0.0
    %1249 = vmatpush1.msra.mxu0 0.0
    %1250 = vmatprep.subr.mxu0 0.0
    %1251 = vmatpush1.msra.mxu0 0.0
    %1252 = vmatprep.subr.mxu0 0.0
    %1253 = vmatpush1.msra.mxu0 0.0
    %1254 = vmatprep.subr.mxu0 0.0
    %1255 = vmatpush1.msra.mxu0 0.0
    %1256 = vmatprep.subr.mxu0 0.0
    %1257 = vmatpush1.msra.mxu0 0.0
    %1258 = vmatprep.subr.mxu0 0.0
    %1259 = vmatpush1.msra.mxu0 0.0
    %1260 = vmatprep.subr.mxu0 0.0
    %1261 = vmatpush1.msra.mxu0 0.0
    %1262 = vmatprep.subr.mxu0 0.0
    %1263 = vmatpush1.msra.mxu0 0.0
    %1264 = vmatprep.subr.mxu0 0.0
    %1265 = vmatpush1.msra.mxu0 0.0
    %1266 = vmatprep.subr.mxu0 0.0
    %1267 = vmatpush1.msra.mxu0 0.0
    %1268 = vmatprep.subr.mxu0 0.0
    %1269 = vmatpush1.msra.mxu0 0.0
    %1270 = vmatprep.subr.mxu0 0.0
    %1271 = vmatpush1.msra.mxu0 0.0
    %1272 = vmatprep.subr.mxu0 0.0
    %1273 = vmatpush1.msra.mxu0 0.0
    %1274 = vmatprep.subr.mxu0 0.0
    %1275 = vmatpush1.msra.mxu0 0.0
    %1276 = vmatprep.subr.mxu0 0.0
    %1277 = vmatpush1.msra.mxu0 0.0
    %1278 = vmatprep.subr.mxu0 0.0
    %1279 = vmatpush1.msra.mxu0 0.0
    %1280 = vmatprep.mubr.f32.mxu0 0.0
    %1281 = vmatmul.mubr.f32.gmra.mrb[0].mxu0 %v1214
    %v1282 = vpop.f32.mrb[0].mxu0
    %v1283 = vadd.f32 0.0, %v1282
    %v1284 = vpop.f32.mrb[0].mxu0
    %1285 = vdwg.mxu0
    %v1287 = vsel %vm132, %v1210, 0
    %1289 = vmatprep.subr.mxu0 0.0
    %1290 = vmatpush1.msra.mxu0 %v42
    %1291 = vmatprep.subr.mxu0 0.0
    %1292 = vmatpush1.msra.mxu0 %v43
    %1293 = vmatprep.subr.mxu0 0.0
    %1294 = vmatpush1.msra.mxu0 %v44
    %1295 = vmatprep.subr.mxu0 0.0
    %1296 = vmatpush1.msra.mxu0 %v45
    %1297 = vmatprep.subr.mxu0 0.0
    %1298 = vmatpush1.msra.mxu0 0.0
    %1299 = vmatprep.subr.mxu0 0.0
    %1300 = vmatpush1.msra.mxu0 0.0
    %1301 = vmatprep.subr.mxu0 0.0
    %1302 = vmatpush1.msra.mxu0 0.0
    %1303 = vmatprep.subr.mxu0 0.0
    %1304 = vmatpush1.msra.mxu0 0.0
    %1305 = vmatprep.subr.mxu0 0.0
    %1306 = vmatpush1.msra.mxu0 0.0
    %1307 = vmatprep.subr.mxu0 0.0
    %1308 = vmatpush1.msra.mxu0 0.0
    %1309 = vmatprep.subr.mxu0 0.0
    %1310 = vmatpush1.msra.mxu0 0.0
    %1311 = vmatprep.subr.mxu0 0.0
    %1312 = vmatpush1.msra.mxu0 0.0
    %1313 = vmatprep.subr.mxu0 0.0
    %1314 = vmatpush1.msra.mxu0 0.0
    %1315 = vmatprep.subr.mxu0 0.0
    %1316 = vmatpush1.msra.mxu0 0.0
    %1317 = vmatprep.subr.mxu0 0.0
    %1318 = vmatpush1.msra.mxu0 0.0
    %1319 = vmatprep.subr.mxu0 0.0
    %1320 = vmatpush1.msra.mxu0 0.0
    %1321 = vmatprep.subr.mxu0 0.0
    %1322 = vmatpush1.msra.mxu0 0.0
    %1323 = vmatprep.subr.mxu0 0.0
    %1324 = vmatpush1.msra.mxu0 0.0
    %1325 = vmatprep.subr.mxu0 0.0
    %1326 = vmatpush1.msra.mxu0 0.0
    %1327 = vmatprep.subr.mxu0 0.0
    %1328 = vmatpush1.msra.mxu0 0.0
    %1329 = vmatprep.subr.mxu0 0.0
    %1330 = vmatpush1.msra.mxu0 0.0
    %1331 = vmatprep.subr.mxu0 0.0
    %1332 = vmatpush1.msra.mxu0 0.0
    %1333 = vmatprep.subr.mxu0 0.0
    %1334 = vmatpush1.msra.mxu0 0.0
    %1335 = vmatprep.subr.mxu0 0.0
    %1336 = vmatpush1.msra.mxu0 0.0
    %1337 = vmatprep.subr.mxu0 0.0
    %1338 = vmatpush1.msra.mxu0 0.0
    %1339 = vmatprep.subr.mxu0 0.0
    %1340 = vmatpush1.msra.mxu0 0.0
    %1341 = vmatprep.subr.mxu0 0.0
    %1342 = vmatpush1.msra.mxu0 0.0
    %1343 = vmatprep.subr.mxu0 0.0
    %1344 = vmatpush1.msra.mxu0 0.0
    %1345 = vmatprep.subr.mxu0 0.0
    %1346 = vmatpush1.msra.mxu0 0.0
    %1347 = vmatprep.subr.mxu0 0.0
    %1348 = vmatpush1.msra.mxu0 0.0
    %1349 = vmatprep.subr.mxu0 0.0
    %1350 = vmatpush1.msra.mxu0 0.0
    %1351 = vmatprep.subr.mxu0 0.0
    %1352 = vmatpush1.msra.mxu0 0.0
    %1353 = vmatprep.mubr.f32.mxu0 0.0
    %1354 = vmatmul.mubr.f32.gmra.mrb[0].mxu0 %v1287
    %v1355 = vpop.f32.mrb[0].mxu0
    %v1356 = vadd.f32 %v1283, %v1355
    %v1357 = vpop.f32.mrb[0].mxu0
    %1358 = vdwg.mxu0
    %v1359 = vadd.f32 %v1356, %v50
    %v1360 = vxor.u32 %v1359, 2147483648
    %v1361 = vmul.f32 %v1360, 1.442695
    %v1362 = vpow.pop %v1361
    %v1363 = vadd.f32 %v1362, 1.0
    %v1364 = vrcp.pop %v1363
    %v1365 = vmul.f32 1.0, %v1364
    %1367 = vrot.lane.b32.xlu0 %v1359, 32
    %v1368 = vpop.permute.xlu0 %1367
    %v1370 = vmul.f32 %v1365, %v1368
    %1372 = vrot.lane.b32.xlu0 %v1370, 64
    %v1373 = vpop.permute.xlu0 %1372
    %v1375 = vadd.f32 %v1359, %v1373
    %v1376 = vtanh.pop %v1375
    %v1377 = vsub.f32 1.0, %v1365
    %1379 = vrot.lane.b32.xlu0 %v1376, 96
    %v1380 = vpop.permute.xlu0 %1379
    %v1382 = vmul.f32 %v1377, %v1380
    %v1383 = vmul.f32 %v1365, %v1118
    %v1384 = vadd.f32 %v1382, %v1383
    %v1385 = vmul.f32 %v1384, %v318
    %1387 = vrot.lane.b32.xlu0 %v1385, 96
    %v1388 = vpop.permute.xlu0 %1387
    %v1390 = vsel %vm325, %v1388, 0.0
    %1391 = vadd.xlane.f32.xlu0 %v1390
    %v1392 = vpop.xlane.xlu0 %1391
    %v1393 = vadd.f32 %v1392, %v52
    %vm1394 = vcmp.eq.s32.totalorder %v54, 4
    %1396 = vset.pattern.permute.xlu0 0
    %1397 = vperm.xlu0 %1396, %v1393
    %v1398 = vpop.permute.xlu0 %1397
    %v1400 = vsel %vm1394, %v1398, %v1134
    %s1401 = scalar_lea.vmem %s0, 5
    %v1402 = vld [vmem:[%s1401] sm:$0x1]
    %v1404 = vsel %vm57, %v1402, 0
    %1406 = vmatprep.subr.mxu0 0.0
    %1407 = vmatpush1.msra.mxu0 %v35
    %1408 = vmatprep.subr.mxu0 0.0
    %1409 = vmatpush1.msra.mxu0 %v36
    %1410 = vmatprep.subr.mxu0 0.0
    %1411 = vmatpush1.msra.mxu0 %v37
    %1412 = vmatprep.subr.mxu0 0.0
    %1413 = vmatpush1.msra.mxu0 %v38
    %1414 = vmatprep.subr.mxu0 0.0
    %1415 = vmatpush1.msra.mxu0 %v39
    %1416 = vmatprep.subr.mxu0 0.0
    %1417 = vmatpush1.msra.mxu0 %v40
    %1418 = vmatprep.subr.mxu0 0.0
    %1419 = vmatpush1.msra.mxu0 0.0
    %1420 = vmatprep.subr.mxu0 0.0
    %1421 = vmatpush1.msra.mxu0 0.0
    %1422 = vmatprep.subr.mxu0 0.0
    %1423 = vmatpush1.msra.mxu0 0.0
    %1424 = vmatprep.subr.mxu0 0.0
    %1425 = vmatpush1.msra.mxu0 0.0
    %1426 = vmatprep.subr.mxu0 0.0
    %1427 = vmatpush1.msra.mxu0 0.0
    %1428 = vmatprep.subr.mxu0 0.0
    %1429 = vmatpush1.msra.mxu0 0.0
    %1430 = vmatprep.subr.mxu0 0.0
    %1431 = vmatpush1.msra.mxu0 0.0
    %1432 = vmatprep.subr.mxu0 0.0
    %1433 = vmatpush1.msra.mxu0 0.0
    %1434 = vmatprep.subr.mxu0 0.0
    %1435 = vmatpush1.msra.mxu0 0.0
    %1436 = vmatprep.subr.mxu0 0.0
    %1437 = vmatpush1.msra.mxu0 0.0
    %1438 = vmatprep.subr.mxu0 0.0
    %1439 = vmatpush1.msra.mxu0 0.0
    %1440 = vmatprep.subr.mxu0 0.0
    %1441 = vmatpush1.msra.mxu0 0.0
    %1442 = vmatprep.subr.mxu0 0.0
    %1443 = vmatpush1.msra.mxu0 0.0
    %1444 = vmatprep.subr.mxu0 0.0
    %1445 = vmatpush1.msra.mxu0 0.0
    %1446 = vmatprep.subr.mxu0 0.0
    %1447 = vmatpush1.msra.mxu0 0.0
    %1448 = vmatprep.subr.mxu0 0.0
    %1449 = vmatpush1.msra.mxu0 0.0
    %1450 = vmatprep.subr.mxu0 0.0
    %1451 = vmatpush1.msra.mxu0 0.0
    %1452 = vmatprep.subr.mxu0 0.0
    %1453 = vmatpush1.msra.mxu0 0.0
    %1454 = vmatprep.subr.mxu0 0.0
    %1455 = vmatpush1.msra.mxu0 0.0
    %1456 = vmatprep.subr.mxu0 0.0
    %1457 = vmatpush1.msra.mxu0 0.0
    %1458 = vmatprep.subr.mxu0 0.0
    %1459 = vmatpush1.msra.mxu0 0.0
    %1460 = vmatprep.subr.mxu0 0.0
    %1461 = vmatpush1.msra.mxu0 0.0
    %1462 = vmatprep.subr.mxu0 0.0
    %1463 = vmatpush1.msra.mxu0 0.0
    %1464 = vmatprep.subr.mxu0 0.0
    %1465 = vmatpush1.msra.mxu0 0.0
    %1466 = vmatprep.subr.mxu0 0.0
    %1467 = vmatpush1.msra.mxu0 0.0
    %1468 = vmatprep.subr.mxu0 0.0
    %1469 = vmatpush1.msra.mxu0 0.0
    %1470 = vmatprep.mubr.f32.mxu0 0.0
    %1471 = vmatmul.mubr.f32.gmra.mrb[0].mxu0 %v1404
    %v1472 = vpop.f32.mrb[0].mxu0
    %v1473 = vadd.f32 %v41, %v1472
    %v1474 = vpop.f32.mrb[0].mxu0
    %1475 = vdwg.mxu0
    %v1476 = vmax.f32 %v1473, 0.0
    %1478 = vrot.lane.b32.xlu0 %v1384, 96
    %v1479 = vpop.permute.xlu0 %1478
    %v1480 = vsel %vm132, %v1479, 0
    %1482 = vmatprep.subr.mxu0 0.0
    %1483 = vmatpush1.msra.mxu0 %v46
    %1484 = vmatprep.subr.mxu0 0.0
    %1485 = vmatpush1.msra.mxu0 %v47
    %1486 = vmatprep.subr.mxu0 0.0
    %1487 = vmatpush1.msra.mxu0 %v48
    %1488 = vmatprep.subr.mxu0 0.0
    %1489 = vmatpush1.msra.mxu0 %v49
    %1490 = vmatprep.subr.mxu0 0.0
    %1491 = vmatpush1.msra.mxu0 0.0
    %1492 = vmatprep.subr.mxu0 0.0
    %1493 = vmatpush1.msra.mxu0 0.0
    %1494 = vmatprep.subr.mxu0 0.0
    %1495 = vmatpush1.msra.mxu0 0.0
    %1496 = vmatprep.subr.mxu0 0.0
    %1497 = vmatpush1.msra.mxu0 0.0
    %1498 = vmatprep.subr.mxu0 0.0
    %1499 = vmatpush1.msra.mxu0 0.0
    %1500 = vmatprep.subr.mxu0 0.0
    %1501 = vmatpush1.msra.mxu0 0.0
    %1502 = vmatprep.subr.mxu0 0.0
    %1503 = vmatpush1.msra.mxu0 0.0
    %1504 = vmatprep.subr.mxu0 0.0
    %1505 = vmatpush1.msra.mxu0 0.0
    %1506 = vmatprep.subr.mxu0 0.0
    %1507 = vmatpush1.msra.mxu0 0.0
    %1508 = vmatprep.subr.mxu0 0.0
    %1509 = vmatpush1.msra.mxu0 0.0
    %1510 = vmatprep.subr.mxu0 0.0
    %1511 = vmatpush1.msra.mxu0 0.0
    %1512 = vmatprep.subr.mxu0 0.0
    %1513 = vmatpush1.msra.mxu0 0.0
    %1514 = vmatprep.subr.mxu0 0.0
    %1515 = vmatpush1.msra.mxu0 0.0
    %1516 = vmatprep.subr.mxu0 0.0
    %1517 = vmatpush1.msra.mxu0 0.0
    %1518 = vmatprep.subr.mxu0 0.0
    %1519 = vmatpush1.msra.mxu0 0.0
    %1520 = vmatprep.subr.mxu0 0.0
    %1521 = vmatpush1.msra.mxu0 0.0
    %1522 = vmatprep.subr.mxu0 0.0
    %1523 = vmatpush1.msra.mxu0 0.0
    %1524 = vmatprep.subr.mxu0 0.0
    %1525 = vmatpush1.msra.mxu0 0.0
    %1526 = vmatprep.subr.mxu0 0.0
    %1527 = vmatpush1.msra.mxu0 0.0
    %1528 = vmatprep.subr.mxu0 0.0
    %1529 = vmatpush1.msra.mxu0 0.0
    %1530 = vmatprep.subr.mxu0 0.0
    %1531 = vmatpush1.msra.mxu0 0.0
    %1532 = vmatprep.subr.mxu0 0.0
    %1533 = vmatpush1.msra.mxu0 0.0
    %1534 = vmatprep.subr.mxu0 0.0
    %1535 = vmatpush1.msra.mxu0 0.0
    %1536 = vmatprep.subr.mxu0 0.0
    %1537 = vmatpush1.msra.mxu0 0.0
    %1538 = vmatprep.subr.mxu0 0.0
    %1539 = vmatpush1.msra.mxu0 0.0
    %1540 = vmatprep.subr.mxu0 0.0
    %1541 = vmatpush1.msra.mxu0 0.0
    %1542 = vmatprep.subr.mxu0 0.0
    %1543 = vmatpush1.msra.mxu0 0.0
    %1544 = vmatprep.subr.mxu0 0.0
    %1545 = vmatpush1.msra.mxu0 0.0
    %1546 = vmatprep.mubr.f32.mxu0 0.0
    %1547 = vmatmul.mubr.f32.gmra.mrb[0].mxu0 %v1480
    %v1548 = vpop.f32.mrb[0].mxu0
    %v1549 = vadd.f32 0.0, %v1548
    %v1550 = vpop.f32.mrb[0].mxu0
    %1551 = vdwg.mxu0
    %v1553 = vsel %vm132, %v1476, 0
    %1555 = vmatprep.subr.mxu0 0.0
    %1556 = vmatpush1.msra.mxu0 %v42
    %1557 = vmatprep.subr.mxu0 0.0
    %1558 = vmatpush1.msra.mxu0 %v43
    %1559 = vmatprep.subr.mxu0 0.0
    %1560 = vmatpush1.msra.mxu0 %v44
    %1561 = vmatprep.subr.mxu0 0.0
    %1562 = vmatpush1.msra.mxu0 %v45
    %1563 = vmatprep.subr.mxu0 0.0
    %1564 = vmatpush1.msra.mxu0 0.0
    %1565 = vmatprep.subr.mxu0 0.0
    %1566 = vmatpush1.msra.mxu0 0.0
    %1567 = vmatprep.subr.mxu0 0.0
    %1568 = vmatpush1.msra.mxu0 0.0
    %1569 = vmatprep.subr.mxu0 0.0
    %1570 = vmatpush1.msra.mxu0 0.0
    %1571 = vmatprep.subr.mxu0 0.0
    %1572 = vmatpush1.msra.mxu0 0.0
    %1573 = vmatprep.subr.mxu0 0.0
    %1574 = vmatpush1.msra.mxu0 0.0
    %1575 = vmatprep.subr.mxu0 0.0
    %1576 = vmatpush1.msra.mxu0 0.0
    %1577 = vmatprep.subr.mxu0 0.0
    %1578 = vmatpush1.msra.mxu0 0.0
    %1579 = vmatprep.subr.mxu0 0.0
    %1580 = vmatpush1.msra.mxu0 0.0
    %1581 = vmatprep.subr.mxu0 0.0
    %1582 = vmatpush1.msra.mxu0 0.0
    %1583 = vmatprep.subr.mxu0 0.0
    %1584 = vmatpush1.msra.mxu0 0.0
    %1585 = vmatprep.subr.mxu0 0.0
    %1586 = vmatpush1.msra.mxu0 0.0
    %1587 = vmatprep.subr.mxu0 0.0
    %1588 = vmatpush1.msra.mxu0 0.0
    %1589 = vmatprep.subr.mxu0 0.0
    %1590 = vmatpush1.msra.mxu0 0.0
    %1591 = vmatprep.subr.mxu0 0.0
    %1592 = vmatpush1.msra.mxu0 0.0
    %1593 = vmatprep.subr.mxu0 0.0
    %1594 = vmatpush1.msra.mxu0 0.0
    %1595 = vmatprep.subr.mxu0 0.0
    %1596 = vmatpush1.msra.mxu0 0.0
    %1597 = vmatprep.subr.mxu0 0.0
    %1598 = vmatpush1.msra.mxu0 0.0
    %1599 = vmatprep.subr.mxu0 0.0
    %1600 = vmatpush1.msra.mxu0 0.0
    %1601 = vmatprep.subr.mxu0 0.0
    %1602 = vmatpush1.msra.mxu0 0.0
    %1603 = vmatprep.subr.mxu0 0.0
    %1604 = vmatpush1.msra.mxu0 0.0
    %1605 = vmatprep.subr.mxu0 0.0
    %1606 = vmatpush1.msra.mxu0 0.0
    %1607 = vmatprep.subr.mxu0 0.0
    %1608 = vmatpush1.msra.mxu0 0.0
    %1609 = vmatprep.subr.mxu0 0.0
    %1610 = vmatpush1.msra.mxu0 0.0
    %1611 = vmatprep.subr.mxu0 0.0
    %1612 = vmatpush1.msra.mxu0 0.0
    %1613 = vmatprep.subr.mxu0 0.0
    %1614 = vmatpush1.msra.mxu0 0.0
    %1615 = vmatprep.subr.mxu0 0.0
    %1616 = vmatpush1.msra.mxu0 0.0
    %1617 = vmatprep.subr.mxu0 0.0
    %1618 = vmatpush1.msra.mxu0 0.0
    %1619 = vmatprep.mubr.f32.mxu0 0.0
    %1620 = vmatmul.mubr.f32.gmra.mrb[0].mxu0 %v1553
    %v1621 = vpop.f32.mrb[0].mxu0
    %v1622 = vadd.f32 %v1549, %v1621
    %v1623 = vpop.f32.mrb[0].mxu0
    %1624 = vdwg.mxu0
    %v1625 = vadd.f32 %v1622, %v50
    %v1626 = vxor.u32 %v1625, 2147483648
    %v1627 = vmul.f32 %v1626, 1.442695
    %v1628 = vpow.pop %v1627
    %v1629 = vadd.f32 %v1628, 1.0
    %v1630 = vrcp.pop %v1629
    %v1631 = vmul.f32 1.0, %v1630
    %1633 = vrot.lane.b32.xlu0 %v1625, 32
    %v1634 = vpop.permute.xlu0 %1633
    %v1636 = vmul.f32 %v1631, %v1634
    %1638 = vrot.lane.b32.xlu0 %v1636, 64
    %v1639 = vpop.permute.xlu0 %1638
    %v1641 = vadd.f32 %v1625, %v1639
    %v1642 = vtanh.pop %v1641
    %v1643 = vsub.f32 1.0, %v1631
    %1645 = vrot.lane.b32.xlu0 %v1642, 96
    %v1646 = vpop.permute.xlu0 %1645
    %v1648 = vmul.f32 %v1643, %v1646
    %v1649 = vmul.f32 %v1631, %v1384
    %v1650 = vadd.f32 %v1648, %v1649
    %v1651 = vmul.f32 %v1650, %v318
    %1653 = vrot.lane.b32.xlu0 %v1651, 96
    %v1654 = vpop.permute.xlu0 %1653
    %v1656 = vsel %vm325, %v1654, 0.0
    %1657 = vadd.xlane.f32.xlu0 %v1656
    %v1658 = vpop.xlane.xlu0 %1657
    %v1659 = vadd.f32 %v1658, %v52
    %vm1660 = vcmp.eq.s32.totalorder %v54, 5
    %1662 = vset.pattern.permute.xlu0 0
    %1663 = vperm.xlu0 %1662, %v1659
    %v1664 = vpop.permute.xlu0 %1663
    %v1666 = vsel %vm1660, %v1664, %v1400
    %s1667 = scalar_lea.vmem %s0, 6
    %v1668 = vld [vmem:[%s1667] sm:$0x1]
    %v1670 = vsel %vm57, %v1668, 0
    %1672 = vmatprep.subr.mxu0 0.0
    %1673 = vmatpush1.msra.mxu0 %v35
    %1674 = vmatprep.subr.mxu0 0.0
    %1675 = vmatpush1.msra.mxu0 %v36
    %1676 = vmatprep.subr.mxu0 0.0
    %1677 = vmatpush1.msra.mxu0 %v37
    %1678 = vmatprep.subr.mxu0 0.0
    %1679 = vmatpush1.msra.mxu0 %v38
    %1680 = vmatprep.subr.mxu0 0.0
    %1681 = vmatpush1.msra.mxu0 %v39
    %1682 = vmatprep.subr.mxu0 0.0
    %1683 = vmatpush1.msra.mxu0 %v40
    %1684 = vmatprep.subr.mxu0 0.0
    %1685 = vmatpush1.msra.mxu0 0.0
    %1686 = vmatprep.subr.mxu0 0.0
    %1687 = vmatpush1.msra.mxu0 0.0
    %1688 = vmatprep.subr.mxu0 0.0
    %1689 = vmatpush1.msra.mxu0 0.0
    %1690 = vmatprep.subr.mxu0 0.0
    %1691 = vmatpush1.msra.mxu0 0.0
    %1692 = vmatprep.subr.mxu0 0.0
    %1693 = vmatpush1.msra.mxu0 0.0
    %1694 = vmatprep.subr.mxu0 0.0
    %1695 = vmatpush1.msra.mxu0 0.0
    %1696 = vmatprep.subr.mxu0 0.0
    %1697 = vmatpush1.msra.mxu0 0.0
    %1698 = vmatprep.subr.mxu0 0.0
    %1699 = vmatpush1.msra.mxu0 0.0
    %1700 = vmatprep.subr.mxu0 0.0
    %1701 = vmatpush1.msra.mxu0 0.0
    %1702 = vmatprep.subr.mxu0 0.0
    %1703 = vmatpush1.msra.mxu0 0.0
    %1704 = vmatprep.subr.mxu0 0.0
    %1705 = vmatpush1.msra.mxu0 0.0
    %1706 = vmatprep.subr.mxu0 0.0
    %1707 = vmatpush1.msra.mxu0 0.0
    %1708 = vmatprep.subr.mxu0 0.0
    %1709 = vmatpush1.msra.mxu0 0.0
    %1710 = vmatprep.subr.mxu0 0.0
    %1711 = vmatpush1.msra.mxu0 0.0
    %1712 = vmatprep.subr.mxu0 0.0
    %1713 = vmatpush1.msra.mxu0 0.0
    %1714 = vmatprep.subr.mxu0 0.0
    %1715 = vmatpush1.msra.mxu0 0.0
    %1716 = vmatprep.subr.mxu0 0.0
    %1717 = vmatpush1.msra.mxu0 0.0
    %1718 = vmatprep.subr.mxu0 0.0
    %1719 = vmatpush1.msra.mxu0 0.0
    %1720 = vmatprep.subr.mxu0 0.0
    %1721 = vmatpush1.msra.mxu0 0.0
    %1722 = vmatprep.subr.mxu0 0.0
    %1723 = vmatpush1.msra.mxu0 0.0
    %1724 = vmatprep.subr.mxu0 0.0
    %1725 = vmatpush1.msra.mxu0 0.0
    %1726 = vmatprep.subr.mxu0 0.0
    %1727 = vmatpush1.msra.mxu0 0.0
    %1728 = vmatprep.subr.mxu0 0.0
    %1729 = vmatpush1.msra.mxu0 0.0
    %1730 = vmatprep.subr.mxu0 0.0
    %1731 = vmatpush1.msra.mxu0 0.0
    %1732 = vmatprep.subr.mxu0 0.0
    %1733 = vmatpush1.msra.mxu0 0.0
    %1734 = vmatprep.subr.mxu0 0.0
    %1735 = vmatpush1.msra.mxu0 0.0
    %1736 = vmatprep.mubr.f32.mxu0 0.0
    %1737 = vmatmul.mubr.f32.gmra.mrb[0].mxu0 %v1670
    %v1738 = vpop.f32.mrb[0].mxu0
    %v1739 = vadd.f32 %v41, %v1738
    %v1740 = vpop.f32.mrb[0].mxu0
    %1741 = vdwg.mxu0
    %v1742 = vmax.f32 %v1739, 0.0
    %1744 = vrot.lane.b32.xlu0 %v1650, 96
    %v1745 = vpop.permute.xlu0 %1744
    %v1746 = vsel %vm132, %v1745, 0
    %1748 = vmatprep.subr.mxu0 0.0
    %1749 = vmatpush1.msra.mxu0 %v46
    %1750 = vmatprep.subr.mxu0 0.0
    %1751 = vmatpush1.msra.mxu0 %v47
    %1752 = vmatprep.subr.mxu0 0.0
    %1753 = vmatpush1.msra.mxu0 %v48
    %1754 = vmatprep.subr.mxu0 0.0
    %1755 = vmatpush1.msra.mxu0 %v49
    %1756 = vmatprep.subr.mxu0 0.0
    %1757 = vmatpush1.msra.mxu0 0.0
    %1758 = vmatprep.subr.mxu0 0.0
    %1759 = vmatpush1.msra.mxu0 0.0
    %1760 = vmatprep.subr.mxu0 0.0
    %1761 = vmatpush1.msra.mxu0 0.0
    %1762 = vmatprep.subr.mxu0 0.0
    %1763 = vmatpush1.msra.mxu0 0.0
    %1764 = vmatprep.subr.mxu0 0.0
    %1765 = vmatpush1.msra.mxu0 0.0
    %1766 = vmatprep.subr.mxu0 0.0
    %1767 = vmatpush1.msra.mxu0 0.0
    %1768 = vmatprep.subr.mxu0 0.0
    %1769 = vmatpush1.msra.mxu0 0.0
    %1770 = vmatprep.subr.mxu0 0.0
    %1771 = vmatpush1.msra.mxu0 0.0
    %1772 = vmatprep.subr.mxu0 0.0
    %1773 = vmatpush1.msra.mxu0 0.0
    %1774 = vmatprep.subr.mxu0 0.0
    %1775 = vmatpush1.msra.mxu0 0.0
    %1776 = vmatprep.subr.mxu0 0.0
    %1777 = vmatpush1.msra.mxu0 0.0
    %1778 = vmatprep.subr.mxu0 0.0
    %1779 = vmatpush1.msra.mxu0 0.0
    %1780 = vmatprep.subr.mxu0 0.0
    %1781 = vmatpush1.msra.mxu0 0.0
    %1782 = vmatprep.subr.mxu0 0.0
    %1783 = vmatpush1.msra.mxu0 0.0
    %1784 = vmatprep.subr.mxu0 0.0
    %1785 = vmatpush1.msra.mxu0 0.0
    %1786 = vmatprep.subr.mxu0 0.0
    %1787 = vmatpush1.msra.mxu0 0.0
    %1788 = vmatprep.subr.mxu0 0.0
    %1789 = vmatpush1.msra.mxu0 0.0
    %1790 = vmatprep.subr.mxu0 0.0
    %1791 = vmatpush1.msra.mxu0 0.0
    %1792 = vmatprep.subr.mxu0 0.0
    %1793 = vmatpush1.msra.mxu0 0.0
    %1794 = vmatprep.subr.mxu0 0.0
    %1795 = vmatpush1.msra.mxu0 0.0
    %1796 = vmatprep.subr.mxu0 0.0
    %1797 = vmatpush1.msra.mxu0 0.0
    %1798 = vmatprep.subr.mxu0 0.0
    %1799 = vmatpush1.msra.mxu0 0.0
    %1800 = vmatprep.subr.mxu0 0.0
    %1801 = vmatpush1.msra.mxu0 0.0
    %1802 = vmatprep.subr.mxu0 0.0
    %1803 = vmatpush1.msra.mxu0 0.0
    %1804 = vmatprep.subr.mxu0 0.0
    %1805 = vmatpush1.msra.mxu0 0.0
    %1806 = vmatprep.subr.mxu0 0.0
    %1807 = vmatpush1.msra.mxu0 0.0
    %1808 = vmatprep.subr.mxu0 0.0
    %1809 = vmatpush1.msra.mxu0 0.0
    %1810 = vmatprep.subr.mxu0 0.0
    %1811 = vmatpush1.msra.mxu0 0.0
    %1812 = vmatprep.mubr.f32.mxu0 0.0
    %1813 = vmatmul.mubr.f32.gmra.mrb[0].mxu0 %v1746
    %v1814 = vpop.f32.mrb[0].mxu0
    %v1815 = vadd.f32 0.0, %v1814
    %v1816 = vpop.f32.mrb[0].mxu0
    %1817 = vdwg.mxu0
    %v1819 = vsel %vm132, %v1742, 0
    %1821 = vmatprep.subr.mxu0 0.0
    %1822 = vmatpush1.msra.mxu0 %v42
    %1823 = vmatprep.subr.mxu0 0.0
    %1824 = vmatpush1.msra.mxu0 %v43
    %1825 = vmatprep.subr.mxu0 0.0
    %1826 = vmatpush1.msra.mxu0 %v44
    %1827 = vmatprep.subr.mxu0 0.0
    %1828 = vmatpush1.msra.mxu0 %v45
    %1829 = vmatprep.subr.mxu0 0.0
    %1830 = vmatpush1.msra.mxu0 0.0
    %1831 = vmatprep.subr.mxu0 0.0
    %1832 = vmatpush1.msra.mxu0 0.0
    %1833 = vmatprep.subr.mxu0 0.0
    %1834 = vmatpush1.msra.mxu0 0.0
    %1835 = vmatprep.subr.mxu0 0.0
    %1836 = vmatpush1.msra.mxu0 0.0
    %1837 = vmatprep.subr.mxu0 0.0
    %1838 = vmatpush1.msra.mxu0 0.0
    %1839 = vmatprep.subr.mxu0 0.0
    %1840 = vmatpush1.msra.mxu0 0.0
    %1841 = vmatprep.subr.mxu0 0.0
    %1842 = vmatpush1.msra.mxu0 0.0
    %1843 = vmatprep.subr.mxu0 0.0
    %1844 = vmatpush1.msra.mxu0 0.0
    %1845 = vmatprep.subr.mxu0 0.0
    %1846 = vmatpush1.msra.mxu0 0.0
    %1847 = vmatprep.subr.mxu0 0.0
    %1848 = vmatpush1.msra.mxu0 0.0
    %1849 = vmatprep.subr.mxu0 0.0
    %1850 = vmatpush1.msra.mxu0 0.0
    %1851 = vmatprep.subr.mxu0 0.0
    %1852 = vmatpush1.msra.mxu0 0.0
    %1853 = vmatprep.subr.mxu0 0.0
    %1854 = vmatpush1.msra.mxu0 0.0
    %1855 = vmatprep.subr.mxu0 0.0
    %1856 = vmatpush1.msra.mxu0 0.0
    %1857 = vmatprep.subr.mxu0 0.0
    %1858 = vmatpush1.msra.mxu0 0.0
    %1859 = vmatprep.subr.mxu0 0.0
    %1860 = vmatpush1.msra.mxu0 0.0
    %1861 = vmatprep.subr.mxu0 0.0
    %1862 = vmatpush1.msra.mxu0 0.0
    %1863 = vmatprep.subr.mxu0 0.0
    %1864 = vmatpush1.msra.mxu0 0.0
    %1865 = vmatprep.subr.mxu0 0.0
    %1866 = vmatpush1.msra.mxu0 0.0
    %1867 = vmatprep.subr.mxu0 0.0
    %1868 = vmatpush1.msra.mxu0 0.0
    %1869 = vmatprep.subr.mxu0 0.0
    %1870 = vmatpush1.msra.mxu0 0.0
    %1871 = vmatprep.subr.mxu0 0.0
    %1872 = vmatpush1.msra.mxu0 0.0
    %1873 = vmatprep.subr.mxu0 0.0
    %1874 = vmatpush1.msra.mxu0 0.0
    %1875 = vmatprep.subr.mxu0 0.0
    %1876 = vmatpush1.msra.mxu0 0.0
    %1877 = vmatprep.subr.mxu0 0.0
    %1878 = vmatpush1.msra.mxu0 0.0
    %1879 = vmatprep.subr.mxu0 0.0
    %1880 = vmatpush1.msra.mxu0 0.0
    %1881 = vmatprep.subr.mxu0 0.0
    %1882 = vmatpush1.msra.mxu0 0.0
    %1883 = vmatprep.subr.mxu0 0.0
    %1884 = vmatpush1.msra.mxu0 0.0
    %1885 = vmatprep.mubr.f32.mxu0 0.0
    %1886 = vmatmul.mubr.f32.gmra.mrb[0].mxu0 %v1819
    %v1887 = vpop.f32.mrb[0].mxu0
    %v1888 = vadd.f32 %v1815, %v1887
    %v1889 = vpop.f32.mrb[0].mxu0
    %1890 = vdwg.mxu0
    %v1891 = vadd.f32 %v1888, %v50
    %v1892 = vxor.u32 %v1891, 2147483648
    %v1893 = vmul.f32 %v1892, 1.442695
    %v1894 = vpow.pop %v1893
    %v1895 = vadd.f32 %v1894, 1.0
    %v1896 = vrcp.pop %v1895
    %v1897 = vmul.f32 1.0, %v1896
    %1899 = vrot.lane.b32.xlu0 %v1891, 32
    %v1900 = vpop.permute.xlu0 %1899
    %v1902 = vmul.f32 %v1897, %v1900
    %1904 = vrot.lane.b32.xlu0 %v1902, 64
    %v1905 = vpop.permute.xlu0 %1904
    %v1907 = vadd.f32 %v1891, %v1905
    %v1908 = vtanh.pop %v1907
    %v1909 = vsub.f32 1.0, %v1897
    %1911 = vrot.lane.b32.xlu0 %v1908, 96
    %v1912 = vpop.permute.xlu0 %1911
    %v1914 = vmul.f32 %v1909, %v1912
    %v1915 = vmul.f32 %v1897, %v1650
    %v1916 = vadd.f32 %v1914, %v1915
    %v1917 = vmul.f32 %v1916, %v318
    %1919 = vrot.lane.b32.xlu0 %v1917, 96
    %v1920 = vpop.permute.xlu0 %1919
    %v1922 = vsel %vm325, %v1920, 0.0
    %1923 = vadd.xlane.f32.xlu0 %v1922
    %v1924 = vpop.xlane.xlu0 %1923
    %v1925 = vadd.f32 %v1924, %v52
    %vm1926 = vcmp.eq.s32.totalorder %v54, 6
    %1928 = vset.pattern.permute.xlu0 0
    %1929 = vperm.xlu0 %1928, %v1925
    %v1930 = vpop.permute.xlu0 %1929
    %v1932 = vsel %vm1926, %v1930, %v1666
    %s1933 = scalar_lea.vmem %s0, 7
    %v1934 = vld [vmem:[%s1933] sm:$0x1]
    %v1936 = vsel %vm57, %v1934, 0
    %1938 = vmatprep.subr.mxu0 0.0
    %1939 = vmatpush1.msra.mxu0 %v35
    %1940 = vmatprep.subr.mxu0 0.0
    %1941 = vmatpush1.msra.mxu0 %v36
    %1942 = vmatprep.subr.mxu0 0.0
    %1943 = vmatpush1.msra.mxu0 %v37
    %1944 = vmatprep.subr.mxu0 0.0
    %1945 = vmatpush1.msra.mxu0 %v38
    %1946 = vmatprep.subr.mxu0 0.0
    %1947 = vmatpush1.msra.mxu0 %v39
    %1948 = vmatprep.subr.mxu0 0.0
    %1949 = vmatpush1.msra.mxu0 %v40
    %1950 = vmatprep.subr.mxu0 0.0
    %1951 = vmatpush1.msra.mxu0 0.0
    %1952 = vmatprep.subr.mxu0 0.0
    %1953 = vmatpush1.msra.mxu0 0.0
    %1954 = vmatprep.subr.mxu0 0.0
    %1955 = vmatpush1.msra.mxu0 0.0
    %1956 = vmatprep.subr.mxu0 0.0
    %1957 = vmatpush1.msra.mxu0 0.0
    %1958 = vmatprep.subr.mxu0 0.0
    %1959 = vmatpush1.msra.mxu0 0.0
    %1960 = vmatprep.subr.mxu0 0.0
    %1961 = vmatpush1.msra.mxu0 0.0
    %1962 = vmatprep.subr.mxu0 0.0
    %1963 = vmatpush1.msra.mxu0 0.0
    %1964 = vmatprep.subr.mxu0 0.0
    %1965 = vmatpush1.msra.mxu0 0.0
    %1966 = vmatprep.subr.mxu0 0.0
    %1967 = vmatpush1.msra.mxu0 0.0
    %1968 = vmatprep.subr.mxu0 0.0
    %1969 = vmatpush1.msra.mxu0 0.0
    %1970 = vmatprep.subr.mxu0 0.0
    %1971 = vmatpush1.msra.mxu0 0.0
    %1972 = vmatprep.subr.mxu0 0.0
    %1973 = vmatpush1.msra.mxu0 0.0
    %1974 = vmatprep.subr.mxu0 0.0
    %1975 = vmatpush1.msra.mxu0 0.0
    %1976 = vmatprep.subr.mxu0 0.0
    %1977 = vmatpush1.msra.mxu0 0.0
    %1978 = vmatprep.subr.mxu0 0.0
    %1979 = vmatpush1.msra.mxu0 0.0
    %1980 = vmatprep.subr.mxu0 0.0
    %1981 = vmatpush1.msra.mxu0 0.0
    %1982 = vmatprep.subr.mxu0 0.0
    %1983 = vmatpush1.msra.mxu0 0.0
    %1984 = vmatprep.subr.mxu0 0.0
    %1985 = vmatpush1.msra.mxu0 0.0
    %1986 = vmatprep.subr.mxu0 0.0
    %1987 = vmatpush1.msra.mxu0 0.0
    %1988 = vmatprep.subr.mxu0 0.0
    %1989 = vmatpush1.msra.mxu0 0.0
    %1990 = vmatprep.subr.mxu0 0.0
    %1991 = vmatpush1.msra.mxu0 0.0
    %1992 = vmatprep.subr.mxu0 0.0
    %1993 = vmatpush1.msra.mxu0 0.0
    %1994 = vmatprep.subr.mxu0 0.0
    %1995 = vmatpush1.msra.mxu0 0.0
    %1996 = vmatprep.subr.mxu0 0.0
    %1997 = vmatpush1.msra.mxu0 0.0
    %1998 = vmatprep.subr.mxu0 0.0
    %1999 = vmatpush1.msra.mxu0 0.0
    %2000 = vmatprep.subr.mxu0 0.0
    %2001 = vmatpush1.msra.mxu0 0.0
    %2002 = vmatprep.mubr.f32.mxu0 0.0
    %2003 = vmatmul.mubr.f32.gmra.mrb[0].mxu0 %v1936
    %v2004 = vpop.f32.mrb[0].mxu0
    %v2005 = vadd.f32 %v41, %v2004
    %v2006 = vpop.f32.mrb[0].mxu0
    %2007 = vdwg.mxu0
    %v2008 = vmax.f32 %v2005, 0.0
    %2010 = vrot.lane.b32.xlu0 %v1916, 96
    %v2011 = vpop.permute.xlu0 %2010
    %v2012 = vsel %vm132, %v2011, 0
    %2014 = vmatprep.subr.mxu0 0.0
    %2015 = vmatpush1.msra.mxu0 %v46
    %2016 = vmatprep.subr.mxu0 0.0
    %2017 = vmatpush1.msra.mxu0 %v47
    %2018 = vmatprep.subr.mxu0 0.0
    %2019 = vmatpush1.msra.mxu0 %v48
    %2020 = vmatprep.subr.mxu0 0.0
    %2021 = vmatpush1.msra.mxu0 %v49
    %2022 = vmatprep.subr.mxu0 0.0
    %2023 = vmatpush1.msra.mxu0 0.0
    %2024 = vmatprep.subr.mxu0 0.0
    %2025 = vmatpush1.msra.mxu0 0.0
    %2026 = vmatprep.subr.mxu0 0.0
    %2027 = vmatpush1.msra.mxu0 0.0
    %2028 = vmatprep.subr.mxu0 0.0
    %2029 = vmatpush1.msra.mxu0 0.0
    %2030 = vmatprep.subr.mxu0 0.0
    %2031 = vmatpush1.msra.mxu0 0.0
    %2032 = vmatprep.subr.mxu0 0.0
    %2033 = vmatpush1.msra.mxu0 0.0
    %2034 = vmatprep.subr.mxu0 0.0
    %2035 = vmatpush1.msra.mxu0 0.0
    %2036 = vmatprep.subr.mxu0 0.0
    %2037 = vmatpush1.msra.mxu0 0.0
    %2038 = vmatprep.subr.mxu0 0.0
    %2039 = vmatpush1.msra.mxu0 0.0
    %2040 = vmatprep.subr.mxu0 0.0
    %2041 = vmatpush1.msra.mxu0 0.0
    %2042 = vmatprep.subr.mxu0 0.0
    %2043 = vmatpush1.msra.mxu0 0.0
    %2044 = vmatprep.subr.mxu0 0.0
    %2045 = vmatpush1.msra.mxu0 0.0
    %2046 = vmatprep.subr.mxu0 0.0
    %2047 = vmatpush1.msra.mxu0 0.0
    %2048 = vmatprep.subr.mxu0 0.0
    %2049 = vmatpush1.msra.mxu0 0.0
    %2050 = vmatprep.subr.mxu0 0.0
    %2051 = vmatpush1.msra.mxu0 0.0
    %2052 = vmatprep.subr.mxu0 0.0
    %2053 = vmatpush1.msra.mxu0 0.0
    %2054 = vmatprep.subr.mxu0 0.0
    %2055 = vmatpush1.msra.mxu0 0.0
    %2056 = vmatprep.subr.mxu0 0.0
    %2057 = vmatpush1.msra.mxu0 0.0
    %2058 = vmatprep.subr.mxu0 0.0
    %2059 = vmatpush1.msra.mxu0 0.0
    %2060 = vmatprep.subr.mxu0 0.0
    %2061 = vmatpush1.msra.mxu0 0.0
    %2062 = vmatprep.subr.mxu0 0.0
    %2063 = vmatpush1.msra.mxu0 0.0
    %2064 = vmatprep.subr.mxu0 0.0
    %2065 = vmatpush1.msra.mxu0 0.0
    %2066 = vmatprep.subr.mxu0 0.0
    %2067 = vmatpush1.msra.mxu0 0.0
    %2068 = vmatprep.subr.mxu0 0.0
    %2069 = vmatpush1.msra.mxu0 0.0
    %2070 = vmatprep.subr.mxu0 0.0
    %2071 = vmatpush1.msra.mxu0 0.0
    %2072 = vmatprep.subr.mxu0 0.0
    %2073 = vmatpush1.msra.mxu0 0.0
    %2074 = vmatprep.subr.mxu0 0.0
    %2075 = vmatpush1.msra.mxu0 0.0
    %2076 = vmatprep.subr.mxu0 0.0
    %2077 = vmatpush1.msra.mxu0 0.0
    %2078 = vmatprep.mubr.f32.mxu0 0.0
    %2079 = vmatmul.mubr.f32.gmra.mrb[0].mxu0 %v2012
    %v2080 = vpop.f32.mrb[0].mxu0
    %v2081 = vadd.f32 0.0, %v2080
    %v2082 = vpop.f32.mrb[0].mxu0
    %2083 = vdwg.mxu0
    %v2085 = vsel %vm132, %v2008, 0
    %2087 = vmatprep.subr.mxu0 0.0
    %2088 = vmatpush1.msra.mxu0 %v42
    %2089 = vmatprep.subr.mxu0 0.0
    %2090 = vmatpush1.msra.mxu0 %v43
    %2091 = vmatprep.subr.mxu0 0.0
    %2092 = vmatpush1.msra.mxu0 %v44
    %2093 = vmatprep.subr.mxu0 0.0
    %2094 = vmatpush1.msra.mxu0 %v45
    %2095 = vmatprep.subr.mxu0 0.0
    %2096 = vmatpush1.msra.mxu0 0.0
    %2097 = vmatprep.subr.mxu0 0.0
    %2098 = vmatpush1.msra.mxu0 0.0
    %2099 = vmatprep.subr.mxu0 0.0
    %2100 = vmatpush1.msra.mxu0 0.0
    %2101 = vmatprep.subr.mxu0 0.0
    %2102 = vmatpush1.msra.mxu0 0.0
    %2103 = vmatprep.subr.mxu0 0.0
    %2104 = vmatpush1.msra.mxu0 0.0
    %2105 = vmatprep.subr.mxu0 0.0
    %2106 = vmatpush1.msra.mxu0 0.0
    %2107 = vmatprep.subr.mxu0 0.0
    %2108 = vmatpush1.msra.mxu0 0.0
    %2109 = vmatprep.subr.mxu0 0.0
    %2110 = vmatpush1.msra.mxu0 0.0
    %2111 = vmatprep.subr.mxu0 0.0
    %2112 = vmatpush1.msra.mxu0 0.0
    %2113 = vmatprep.subr.mxu0 0.0
    %2114 = vmatpush1.msra.mxu0 0.0
    %2115 = vmatprep.subr.mxu0 0.0
    %2116 = vmatpush1.msra.mxu0 0.0
    %2117 = vmatprep.subr.mxu0 0.0
    %2118 = vmatpush1.msra.mxu0 0.0
    %2119 = vmatprep.subr.mxu0 0.0
    %2120 = vmatpush1.msra.mxu0 0.0
    %2121 = vmatprep.subr.mxu0 0.0
    %2122 = vmatpush1.msra.mxu0 0.0
    %2123 = vmatprep.subr.mxu0 0.0
    %2124 = vmatpush1.msra.mxu0 0.0
    %2125 = vmatprep.subr.mxu0 0.0
    %2126 = vmatpush1.msra.mxu0 0.0
    %2127 = vmatprep.subr.mxu0 0.0
    %2128 = vmatpush1.msra.mxu0 0.0
    %2129 = vmatprep.subr.mxu0 0.0
    %2130 = vmatpush1.msra.mxu0 0.0
    %2131 = vmatprep.subr.mxu0 0.0
    %2132 = vmatpush1.msra.mxu0 0.0
    %2133 = vmatprep.subr.mxu0 0.0
    %2134 = vmatpush1.msra.mxu0 0.0
    %2135 = vmatprep.subr.mxu0 0.0
    %2136 = vmatpush1.msra.mxu0 0.0
    %2137 = vmatprep.subr.mxu0 0.0
    %2138 = vmatpush1.msra.mxu0 0.0
    %2139 = vmatprep.subr.mxu0 0.0
    %2140 = vmatpush1.msra.mxu0 0.0
    %2141 = vmatprep.subr.mxu0 0.0
    %2142 = vmatpush1.msra.mxu0 0.0
    %2143 = vmatprep.subr.mxu0 0.0
    %2144 = vmatpush1.msra.mxu0 0.0
    %2145 = vmatprep.subr.mxu0 0.0
    %2146 = vmatpush1.msra.mxu0 0.0
    %2147 = vmatprep.subr.mxu0 0.0
    %2148 = vmatpush1.msra.mxu0 0.0
    %2149 = vmatprep.subr.mxu0 0.0
    %2150 = vmatpush1.msra.mxu0 0.0
    %2151 = vmatprep.mubr.f32.mxu0 0.0
    %2152 = vmatmul.mubr.f32.gmra.mrb[0].mxu0 %v2085
    %v2153 = vpop.f32.mrb[0].mxu0
    %v2154 = vadd.f32 %v2081, %v2153
    %v2155 = vpop.f32.mrb[0].mxu0
    %2156 = vdwg.mxu0
    %v2157 = vadd.f32 %v2154, %v50
    %v2158 = vxor.u32 %v2157, 2147483648
    %v2159 = vmul.f32 %v2158, 1.442695
    %v2160 = vpow.pop %v2159
    %v2161 = vadd.f32 %v2160, 1.0
    %v2162 = vrcp.pop %v2161
    %v2163 = vmul.f32 1.0, %v2162
    %2165 = vrot.lane.b32.xlu0 %v2157, 32
    %v2166 = vpop.permute.xlu0 %2165
    %v2168 = vmul.f32 %v2163, %v2166
    %2170 = vrot.lane.b32.xlu0 %v2168, 64
    %v2171 = vpop.permute.xlu0 %2170
    %v2173 = vadd.f32 %v2157, %v2171
    %v2174 = vtanh.pop %v2173
    %v2175 = vsub.f32 1.0, %v2163
    %2177 = vrot.lane.b32.xlu0 %v2174, 96
    %v2178 = vpop.permute.xlu0 %2177
    %v2180 = vmul.f32 %v2175, %v2178
    %v2181 = vmul.f32 %v2163, %v1916
    %v2182 = vadd.f32 %v2180, %v2181
    %v2183 = vmul.f32 %v2182, %v318
    %2185 = vrot.lane.b32.xlu0 %v2183, 96
    %v2186 = vpop.permute.xlu0 %2185
    %v2188 = vsel %vm325, %v2186, 0.0
    %2189 = vadd.xlane.f32.xlu0 %v2188
    %v2190 = vpop.xlane.xlu0 %2189
    %v2191 = vadd.f32 %v2190, %v52
    %vm2192 = vcmp.eq.s32.totalorder %v54, 7
    %2194 = vset.pattern.permute.xlu0 0
    %2195 = vperm.xlu0 %2194, %v2191
    %v2196 = vpop.permute.xlu0 %2195
    %v2198 = vsel %vm2192, %v2196, %v1932
    %2199 = vst [vmem:[#allocation3] sm:$0x1] %v2198
    %2201 = vrot.lane.b32.xlu0 %v2182, 96
    %v2202 = vpop.permute.xlu0 %2201
    %2204 = vst.msk [vmem:[#allocation5] sm:$0x1] %vm325, %v2202
    // Predicated region
    $region34: #{tpu_custom_call.1} parent=1 // pred_check
      _
    $region35: #{tpu_custom_call.1} parent=1 // pred_check_branch
      %2206 = sbr.rel (0) target = $region37
    $region36: #{tpu_custom_call.1} parent=1 // pred_region
      %s2208 = ssub.s32 16, 16
      %2209 = vsyncadd [#allocation4], %s2208
      %s2211 = sshll.u32 [#allocation3], 4
      %s2212 = int_to_ptr.vmem [resolvable:$true] %s2211
      %2214 = dma.vmem_to_hbm [thread:$0]  %s2212, 16, %s8, [#allocation4]
    $region37: #{tpu_custom_call.1} parent=1 // pred_fallthru
      _
    // Predicated region
    $region38: #{tpu_custom_call.1} parent=1 // pred_check
      _
    $region39: #{tpu_custom_call.1} parent=1 // pred_check_branch
      %2216 = sbr.rel (0) target = $region41
    $region40: #{tpu_custom_call.1} parent=1 // pred_region
      %s2218 = ssub.s32 16, 16
      %2219 = vsyncadd [#allocation6], %s2218
      %s2221 = sshll.u32 [#allocation5], 4
      %s2222 = int_to_ptr.vmem [resolvable:$true] %s2221
      %2224 = dma.vmem_to_hbm [thread:$0]  %s2222, 16, %s9, [#allocation6]
    $region41: #{tpu_custom_call.1} parent=1 // pred_fallthru
      _
    // Predicated region
    $region42: #{tpu_custom_call.1} parent=1 // pred_check
      _
    $region43: #{tpu_custom_call.1} parent=1 // pred_check_branch
      %2226 = sbr.rel (0) target = $region45
    $region44: #{tpu_custom_call.1} parent=1 // pred_region
      %2227 = dma.done [#allocation4], 16
    $region45: #{tpu_custom_call.1} parent=1 // pred_fallthru
      _
    // Predicated region
    $region46: #{tpu_custom_call.1} parent=1 // pred_check
      _
    $region47: #{tpu_custom_call.1} parent=1 // pred_check_branch
      %2229 = sbr.rel (0) target = $region49
    $region48: #{tpu_custom_call.1} parent=1 // pred_region
      %2230 = dma.done [#allocation6], 16
    $region49: #{tpu_custom_call.1} parent=1 // pred_fallthru
      _
    %2231 = vsyncpa [#allocation4], 1
    %2232 = vsyncpa [#allocation6], 1

</llo_original>
